<compile_context>
chip_gen: v5e
topology: v5e:2x2
jax: 0.10.0
libtpu: 0.0.40
codegen_flags: <defaults>
</compile_context>

<pallas_src>
import functools
import math

import jax
import jax.numpy as jnp
from jax.experimental import pallas as pl
from jax.experimental.pallas import tpu as pltpu

VOCAB_SIZE = 12
EVAL_HIDDEN = 128   # PredictiveSelfEvaluator.eval_head hidden width
COMP_HIDDEN = 64    # SelfEvalComparator.discriminator hidden width


def _round_up(n, m):
    return ((n + m - 1) // m) * m


def _astro_block_kernel(
    scalars_ref,                       # SMEM (3,): [b_e2, b_c2, decay]
    x_ref, exp_ref, tr_ref,            # (H, TB), (V, TB), (1, TB)
    w_sim_ref, b_sim_ref, w_fh_ref,    # (V, H), (V, 1), (H, H)
    w_pc_ref, b_pc_ref, v_pc_ref,      # (EH+CH, V), (EH+CH, 1), (EH+CH, 1)
    w_c1e_ref, v_h_ref,                # (CH, V), (4H, 1)
    x_out_ref, trace_out_ref, probs_out_ref, score_out_ref,
    *, hidden_dim, eval_hidden):
    """All operands are (features, batch_tile); batch lives on the lane axis."""
    f32 = jnp.float32
    b_e2 = scalars_ref[0]
    b_c2 = scalars_ref[1]
    decay = scalars_ref[2]

    # Cast streamed activations to f32 right after load (v5e has no bf16 VPU/
    # EUP; the bf16 win is purely HBM bytes, which we already got).
    xT = x_ref[...].astype(f32)        # (H, TB)
    expT = exp_ref[...].astype(f32)    # (V, TB)
    trT = tr_ref[...].astype(f32)      # (1, TB)

    # --- sim_head + softmax over vocab (sublane axis) ---------------------
    logits = jnp.dot(w_sim_ref[...], xT, preferred_element_type=f32) + b_sim_ref[...]
    m = jnp.max(logits, axis=0, keepdims=True)              # (1, TB)
    e = jnp.exp(logits - m)
    probs = e / jnp.sum(e, axis=0, keepdims=True)            # (V, TB)

    # --- eval_head[0] and comparator[0] (probs part): one stacked matmul --
    h_pc = jnp.dot(w_pc_ref[...], probs, preferred_element_type=f32) + b_pc_ref[...]
    h_ce = jnp.dot(w_c1e_ref[...], expT, preferred_element_type=f32)   # (CH, TB)

    EH = eval_hidden                                          # 128 (8-aligned)
    h_e = jnp.maximum(h_pc[:EH], 0.0)                         # (EH, TB)
    h_c = jnp.maximum(h_pc[EH:] + h_ce, 0.0)                  # (CH, TB)

    # --- 1-output heads: VPU multiply + sublane reduce (no 1-col MXU push) -
    v_pc = v_pc_ref[...]                                      # (EH+CH, 1)
    rewards = jax.nn.sigmoid(
        jnp.sum(v_pc[:EH] * h_e, axis=0, keepdims=True) + b_e2)   # (1, TB)
    comp = jax.nn.sigmoid(
        jnp.sum(v_pc[EH:] * h_c, axis=0, keepdims=True) + b_c2)   # (1, TB)

    # --- fusion_gate (fused concat), trace update, feedback gate ----------
    H = hidden_dim
    v_h = v_h_ref[...]                                        # (4H, 1)
    w_fr, b_f = v_h[:H], v_h[H:2 * H]
    w_g, b_g = v_h[2 * H:3 * H], v_h[3 * H:]

    adjusted = (jnp.dot(w_fh_ref[...], xT, preferred_element_type=f32)
                + w_fr * rewards + b_f)                       # (H, TB)
    new_trace = decay * trT + (1.0 - decay) * comp            # (1, TB)
    x_out = adjusted + w_g * new_trace + b_g                  # (H, TB)

    x_out_ref[...] = x_out.astype(x_out_ref.dtype)
    trace_out_ref[...] = new_trace.astype(trace_out_ref.dtype)
    probs_out_ref[...] = probs.astype(probs_out_ref.dtype)
    score_out_ref[...] = comp.astype(score_out_ref.dtype)


_WEIGHT_ORDER = ("w_sim", "b_sim", "w_fh", "w_pc", "b_pc", "v_pc", "w_c1e", "v_h")


def _choose_tile(B, H, V, block_b, vmem_budget_bytes):
    """Batch tile (lane) width: multiple of 128, VMEM-budgeted, >=2 tiles for v7x."""
    assert block_b % 128 == 0 and block_b >= 128
    # Conservative f32 accounting: double-buffered streamed inputs + outputs.
    per_col = 2 * 4 * ((H + V + 1) + (H + V + 2))
    tb_cap = max(128, (vmem_budget_bytes // per_col) // 128 * 128)
    tb = min(block_b, tb_cap)
    if B > 128:
        # v7x has 2 TensorCores: give the "parallel" batch axis >= 2 tiles.
        tb = min(tb, _round_up((B + 1) // 2, 128))
    return max(128, min(tb, _round_up(B, 128)))


def astro_transformer_block(xT, expected_probsT, astro_traceT, params, *,
                            decay=0.9, block_b=1024,
                            vmem_budget_bytes=32 * 1024 * 1024):
    """Feature-major entry point (no wrapper transposes, no pad/slice).

    xT: (H, B), expected_probsT: (V, B), astro_traceT: (1, B).
    Returns feature-major (x_outT (H,B), new_traceT (1,B), probsT (V,B), scoreT (1,B)).
    """
    H, B = xT.shape
    V = expected_probsT.shape[0]
    assert expected_probsT.shape == (V, B)
    assert astro_traceT.shape == (1, B)
    assert H % 8 == 0, "hidden_dim must be a multiple of 8 (sublane alignment)"

    weights = [params[k] for k in _WEIGHT_ORDER]
    # Runtime scalars in SMEM: [b_e2, b_c2, decay]  (no recompile per decay).
    scalars = jnp.concatenate(
        [params["b_heads"].astype(jnp.float32),
         jnp.full((1,), decay, jnp.float32)])

    tb = _choose_tile(B, H, V, block_b, vmem_budget_bytes)
    grid = (pl.cdiv(B, tb),)

    in_item = max(xT.dtype.itemsize, expected_probsT.dtype.itemsize,
                  astro_traceT.dtype.itemsize)
    stream_bytes = 2 * tb * ((H + V + 1) * in_item + (H + V + 2) * 4)
    weight_bytes = 2 * sum(int(w.size) * w.dtype.itemsize for w in weights)
    vmem_limit = int(min(max(stream_bytes + weight_bytes + (8 << 20), 16 << 20),
                         64 << 20))

    def tile_spec(rows):
        return pl.BlockSpec((rows, tb), lambda i: (0, i))

    def resident_spec(arr):
        # Weights: full block, constant index_map -> DMA'd once, VMEM-resident.
        return pl.BlockSpec(arr.shape, lambda i: (0, 0))

    smem_spec = pl.BlockSpec(memory_space=pltpu.MemorySpace.SMEM)

    in_specs = [smem_spec, tile_spec(H), tile_spec(V), tile_spec(1)]
    in_specs += [resident_spec(w) for w in weights]
    out_specs = (tile_spec(H), tile_spec(1), tile_spec(V), tile_spec(1))
    out_shape = (
        jax.ShapeDtypeStruct((H, B), xT.dtype),
        jax.ShapeDtypeStruct((1, B), astro_traceT.dtype),
        jax.ShapeDtypeStruct((V, B), xT.dtype),
        jax.ShapeDtypeStruct((1, B), jnp.float32),
    )

    kernel = functools.partial(_astro_block_kernel,
                               hidden_dim=H, eval_hidden=EVAL_HIDDEN)
    return pl.pallas_call(
        kernel,
        grid=grid,
        in_specs=in_specs,
        out_specs=out_specs,
        out_shape=out_shape,
        compiler_params=pltpu.CompilerParams(
            dimension_semantics=("parallel",),
            vmem_limit_bytes=vmem_limit),
    )(scalars, xT, expected_probsT, astro_traceT, *weights)


def astro_transformer_block_batch_major(x, expected_probs, astro_trace, params, **kw):
    """PyTorch-layout convenience wrapper ((B, features) in/out).

    NOTE: the transposes below are exactly the HBM round trips the
    feature-major entry point avoids; keep the surrounding model in
    feature-major layout when this block is on a hot path.
    """
    x_t, tr_t, p_t, s_t = astro_transformer_block(
        x.T, expected_probs.T, astro_trace.reshape(1, -1), params, **kw)
    return x_t.T, tr_t.reshape(-1, 1), p_t.T, s_t.reshape(-1, 1)


def init_params(key, hidden_dim=32, vocab_size=VOCAB_SIZE):
    """nn.Linear-style U(-1/sqrt(fan_in)) init, pre-packed for the kernel.

    Packing (all split/stack boundaries are multiples of 8 sublanes):
      w_pc  = [W_e1 ; W_c1[:, :V]]   (EVAL_HIDDEN+COMP_HIDDEN, V)
      b_pc  = [b_e1 ; b_c1]          column
      v_pc  = [W_e2 row ; W_c2 row]  column
      w_c1e = W_c1[:, V:]            (COMP_HIDDEN, V)
      v_h   = [w_fr ; b_f ; w_g ; b_g]  column (4H, 1)
      b_heads = [b_e2, b_c2]
    """
    H, V = hidden_dim, vocab_size
    assert H % 8 == 0
    ks = jax.random.split(key, 7)

    def lin(k, out_d, in_d):
        kw, kb = jax.random.split(k)
        lim = 1.0 / math.sqrt(in_d)
        w = jax.random.uniform(kw, (out_d, in_d), jnp.float32, -lim, lim)
        b = jax.random.uniform(kb, (out_d,), jnp.float32, -lim, lim)
        return w, b

    w_sim, b_sim = lin(ks[0], V, H)                    # sim_head
    w_e1, b_e1 = lin(ks[1], EVAL_HIDDEN, V)            # eval_head[0]
    w_e2, b_e2 = lin(ks[2], 1, EVAL_HIDDEN)            # eval_head[2]
    w_f, b_f = lin(ks[3], H, H + 1)                    # fusion_gate
    w_c1, b_c1 = lin(ks[4], COMP_HIDDEN, 2 * V)        # comparator[0]
    w_c2, b_c2 = lin(ks[5], 1, COMP_HIDDEN)            # comparator[2]
    w_g, b_g = lin(ks[6], H, 1)                        # feedback gate

    return {
        "w_sim": w_sim,
        "b_sim": b_sim[:, None],
        "w_fh": w_f[:, :H],
        "w_pc": jnp.concatenate([w_e1, w_c1[:, :V]], axis=0),
        "b_pc": jnp.concatenate([b_e1, b_c1])[:, None],
        "v_pc": jnp.concatenate([w_e2[0], w_c2[0]])[:, None],
        "w_c1e": w_c1[:, V:],
        "v_h": jnp.concatenate([w_f[:, H], b_f, w_g[:, 0], b_g])[:, None],
        "b_heads": jnp.stack([b_e2[0], b_c2[0]]),
    }


def _reference(x, expected_probs, astro_trace, params, *, decay=0.9):
    """Plain-JAX forward in the natural (B, features) layout."""
    H = x.shape[-1]
    EH = EVAL_HIDDEN
    w_e1, w_c1p = params["w_pc"][:EH], params["w_pc"][EH:]
    b_e1, b_c1 = params["b_pc"][:EH, 0], params["b_pc"][EH:, 0]
    w_e2, w_c2 = params["v_pc"][:EH, 0], params["v_pc"][EH:, 0]
    b_e2, b_c2 = params["b_heads"][0], params["b_heads"][1]
    w_fr, b_f = params["v_h"][:H, 0], params["v_h"][H:2 * H, 0]
    w_g, b_g = params["v_h"][2 * H:3 * H, 0], params["v_h"][3 * H:, 0]

    logits = x @ params["w_sim"].T + params["b_sim"][:, 0]
    probs = jax.nn.softmax(logits, axis=-1)
    h_e = jnp.maximum(probs @ w_e1.T + b_e1, 0.0)
    rewards = jax.nn.sigmoid(h_e @ w_e2[:, None] + b_e2)               # (B, 1)
    adjusted = x @ params["w_fh"].T + rewards * w_fr + b_f             # concat fused
    h_c = jnp.maximum(probs @ w_c1p.T + expected_probs @ params["w_c1e"].T + b_c1, 0.0)
    comp = jax.nn.sigmoid(h_c @ w_c2[:, None] + b_c2)                  # (B, 1)
    new_trace = decay * astro_trace + (1.0 - decay) * comp
    x_out = adjusted + new_trace * w_g + b_g
    return x_out, new_trace, probs, comp


if __name__ == "__main__":
    key = jax.random.PRNGKey(0)
    k_x, k_e, k_t, k_p = jax.random.split(key, 4)

    B, H, V = 200, 32, VOCAB_SIZE   # B=200: ragged last tile + 2-step grid
    params = init_params(k_p, hidden_dim=H, vocab_size=V)

    # Feature-major activations: this is what the kernel consumes/produces,
    # so there are no wrapper transposes or pad/slice copies around the call.
    xT = jax.random.normal(k_x, (H, B), jnp.float32)
    expT = jax.nn.softmax(jax.random.normal(k_e, (V, B), jnp.float32), axis=0)
    trT = jax.random.normal(k_t, (1, B), jnp.float32)

    outs = astro_transformer_block(xT, expT, trT, params, decay=0.9)
    jax.block_until_ready(outs)

    refs = _reference(xT.T, expT.T, trT.T, params, decay=0.9)
    names = ("x_out", "new_trace", "sim_probs", "comp_score")
    for name, got, want_bm in zip(names, outs, refs):
        want = want_bm.T
        assert got.shape == want.shape, f"{name}: shape {got.shape} vs {want.shape}"
        assert jnp.allclose(got, want, atol=1e-4, rtol=1e-4), f"{name}: mismatch"

    # bf16 activation streaming (halves HBM bytes on v6e/v7x); in-kernel math
    # stays f32, so only input/output rounding differs -> loose tolerance.
    outs_bf16 = astro_transformer_block(
        xT.astype(jnp.bfloat16), expT.astype(jnp.bfloat16), trT, params, decay=0.9)
    jax.block_until_ready(outs_bf16)
    for name, got, want_bm in zip(names, outs_bf16, refs):
        assert jnp.allclose(got.astype(jnp.float32), want_bm.T,
                            atol=1e-1, rtol=1e-1), f"{name}: bf16 mismatch"

    print("KERNEL_OK")
</pallas_src>

<mosaic_0001>
module attributes {stable_mosaic.version = 11 : i64} {
  func.func @_astro_block_kernel(%arg0: i32, %arg1: memref<3xf32, #tpu.memory_space<smem>>, %arg2: memref<32x128xf32, #tpu.memory_space<vmem>>, %arg3: memref<12x128xf32, #tpu.memory_space<vmem>>, %arg4: memref<1x128xf32, #tpu.memory_space<vmem>>, %arg5: memref<12x32xf32, #tpu.memory_space<vmem>>, %arg6: memref<12x1xf32, #tpu.memory_space<vmem>>, %arg7: memref<32x32xf32, #tpu.memory_space<vmem>>, %arg8: memref<192x12xf32, #tpu.memory_space<vmem>>, %arg9: memref<192x1xf32, #tpu.memory_space<vmem>>, %arg10: memref<192x1xf32, #tpu.memory_space<vmem>>, %arg11: memref<64x12xf32, #tpu.memory_space<vmem>>, %arg12: memref<128x1xf32, #tpu.memory_space<vmem>>, %arg13: memref<32x128xf32, #tpu.memory_space<vmem>>, %arg14: memref<1x128xf32, #tpu.memory_space<vmem>>, %arg15: memref<12x128xf32, #tpu.memory_space<vmem>>, %arg16: memref<1x128xf32, #tpu.memory_space<vmem>>) attributes {dimension_semantics = [#tpu.dimension_semantics<parallel>], iteration_bounds = array<i64: 2>, scalar_prefetch = 0 : i64, scratch_operands = 0 : i64, tpu.core_type = #tpu.core_type<tc>, window_params = [{transform_indices = @transform_0, window_bounds = array<i64: 3>}, {transform_indices = @transform_1, window_bounds = array<i64: 32, 128>}, {transform_indices = @transform_2, window_bounds = array<i64: 12, 128>}, {transform_indices = @transform_3, window_bounds = array<i64: 1, 128>}, {pipeline_mode = #tpu.pipeline_mode<synchronous>, transform_indices = @transform_4, window_bounds = array<i64: 12, 32>}, {pipeline_mode = #tpu.pipeline_mode<synchronous>, transform_indices = @transform_5, window_bounds = array<i64: 12, 1>}, {pipeline_mode = #tpu.pipeline_mode<synchronous>, transform_indices = @transform_6, window_bounds = array<i64: 32, 32>}, {pipeline_mode = #tpu.pipeline_mode<synchronous>, transform_indices = @transform_7, window_bounds = array<i64: 192, 12>}, {pipeline_mode = #tpu.pipeline_mode<synchronous>, transform_indices = @transform_8, window_bounds = array<i64: 192, 1>}, {pipeline_mode = #tpu.pipeline_mode<synchronous>, transform_indices = @transform_9, window_bounds = array<i64: 192, 1>}, {pipeline_mode = #tpu.pipeline_mode<synchronous>, transform_indices = @transform_10, window_bounds = array<i64: 64, 12>}, {pipeline_mode = #tpu.pipeline_mode<synchronous>, transform_indices = @transform_11, window_bounds = array<i64: 128, 1>}, {transform_indices = @transform_12, window_bounds = array<i64: 32, 128>}, {transform_indices = @transform_13, window_bounds = array<i64: 1, 128>}, {transform_indices = @transform_14, window_bounds = array<i64: 12, 128>}, {transform_indices = @transform_15, window_bounds = array<i64: 1, 128>}]} {
    %c0 = arith.constant 0 : index
    %0 = memref.load %arg1[%c0] : memref<3xf32, #tpu.memory_space<smem>>
    %c1 = arith.constant 1 : index
    %1 = memref.load %arg1[%c1] : memref<3xf32, #tpu.memory_space<smem>>
    %c2 = arith.constant 2 : index
    %2 = memref.load %arg1[%c2] : memref<3xf32, #tpu.memory_space<smem>>
    %c0_0 = arith.constant 0 : index
    %c0_1 = arith.constant 0 : index
    %3 = vector.load %arg2[%c0_0, %c0_1] : memref<32x128xf32, #tpu.memory_space<vmem>>, vector<32x128xf32>
    %c0_2 = arith.constant 0 : index
    %c0_3 = arith.constant 0 : index
    %4 = vector.load %arg3[%c0_2, %c0_3] : memref<12x128xf32, #tpu.memory_space<vmem>>, vector<12x128xf32>
    %c0_4 = arith.constant 0 : index
    %c0_5 = arith.constant 0 : index
    %5 = vector.load %arg4[%c0_4, %c0_5] : memref<1x128xf32, #tpu.memory_space<vmem>>, vector<1x128xf32>
    %c0_6 = arith.constant 0 : index
    %c0_7 = arith.constant 0 : index
    %6 = vector.load %arg5[%c0_6, %c0_7] : memref<12x32xf32, #tpu.memory_space<vmem>>, vector<12x32xf32>
    %cst = arith.constant dense<0.000000e+00> : vector<12x128xf32>
    %7 = tpu.matmul %6, %3, %cst {dimension_numbers = #tpu.dot_dimension_numbers<[1], [0], [0], [1], [0, 0, 1, 1], [], []>} : vector<12x32xf32>, vector<32x128xf32>, vector<12x128xf32> -> vector<12x128xf32>
    %c0_8 = arith.constant 0 : index
    %c0_9 = arith.constant 0 : index
    %8 = vector.load %arg6[%c0_8, %c0_9] : memref<12x1xf32, #tpu.memory_space<vmem>>, vector<12x1xf32>
    %9 = vector.broadcast %8 : vector<12x1xf32> to vector<12x128xf32>
    %10 = arith.addf %7, %9 : vector<12x128xf32>
    %cst_10 = arith.constant dense<0xFF800000> : vector<128xf32>
    %11 = vector.multi_reduction <maximumf>, %10, %cst_10 [0] : vector<12x128xf32> to vector<128xf32>
    %12 = vector.shape_cast %11 : vector<128xf32> to vector<1x128xf32>
    %13 = vector.broadcast %12 : vector<1x128xf32> to vector<12x128xf32>
    %14 = arith.subf %10, %13 : vector<12x128xf32>
    %15 = math.exp %14 : vector<12x128xf32>
    %cst_11 = arith.constant dense<0.000000e+00> : vector<128xf32>
    %16 = vector.multi_reduction <add>, %15, %cst_11 [0] : vector<12x128xf32> to vector<128xf32>
    %17 = vector.shape_cast %16 : vector<128xf32> to vector<1x128xf32>
    %18 = vector.broadcast %17 : vector<1x128xf32> to vector<12x128xf32>
    %19 = arith.divf %15, %18 : vector<12x128xf32>
    %c0_12 = arith.constant 0 : index
    %c0_13 = arith.constant 0 : index
    %20 = vector.load %arg8[%c0_12, %c0_13] : memref<192x12xf32, #tpu.memory_space<vmem>>, vector<192x12xf32>
    %cst_14 = arith.constant dense<0.000000e+00> : vector<192x128xf32>
    %21 = tpu.matmul %20, %19, %cst_14 {dimension_numbers = #tpu.dot_dimension_numbers<[1], [0], [0], [1], [0, 0, 1, 1], [], []>} : vector<192x12xf32>, vector<12x128xf32>, vector<192x128xf32> -> vector<192x128xf32>
    %c0_15 = arith.constant 0 : index
    %c0_16 = arith.constant 0 : index
    %22 = vector.load %arg9[%c0_15, %c0_16] : memref<192x1xf32, #tpu.memory_space<vmem>>, vector<192x1xf32>
    %23 = vector.broadcast %22 : vector<192x1xf32> to vector<192x128xf32>
    %24 = arith.addf %21, %23 : vector<192x128xf32>
    %c0_17 = arith.constant 0 : index
    %c0_18 = arith.constant 0 : index
    %25 = vector.load %arg11[%c0_17, %c0_18] : memref<64x12xf32, #tpu.memory_space<vmem>>, vector<64x12xf32>
    %cst_19 = arith.constant dense<0.000000e+00> : vector<64x128xf32>
    %26 = tpu.matmul %25, %4, %cst_19 {dimension_numbers = #tpu.dot_dimension_numbers<[1], [0], [0], [1], [0, 0, 1, 1], [], []>} : vector<64x12xf32>, vector<12x128xf32>, vector<64x128xf32> -> vector<64x128xf32>
    %27 = vector.extract_strided_slice %24 {offsets = [0, 0], sizes = [128, 128], strides = [1, 1]} : vector<192x128xf32> to vector<128x128xf32>
    %cst_20 = arith.constant 0.000000e+00 : f32
    %28 = vector.broadcast %cst_20 : f32 to vector<128x128xf32>
    %29 = arith.maximumf %27, %28 : vector<128x128xf32>
    %30 = vector.extract_strided_slice %24 {offsets = [128, 0], sizes = [64, 128], strides = [1, 1]} : vector<192x128xf32> to vector<64x128xf32>
    %31 = arith.addf %30, %26 : vector<64x128xf32>
    %cst_21 = arith.constant 0.000000e+00 : f32
    %32 = vector.broadcast %cst_21 : f32 to vector<64x128xf32>
    %33 = arith.maximumf %31, %32 : vector<64x128xf32>
    %c0_22 = arith.constant 0 : index
    %c0_23 = arith.constant 0 : index
    %34 = vector.load %arg10[%c0_22, %c0_23] : memref<192x1xf32, #tpu.memory_space<vmem>>, vector<192x1xf32>
    %35 = vector.extract_strided_slice %34 {offsets = [0, 0], sizes = [128, 1], strides = [1, 1]} : vector<192x1xf32> to vector<128x1xf32>
    %36 = vector.broadcast %35 : vector<128x1xf32> to vector<128x128xf32>
    %37 = arith.mulf %36, %29 : vector<128x128xf32>
    %cst_24 = arith.constant dense<0.000000e+00> : vector<128xf32>
    %38 = vector.multi_reduction <add>, %37, %cst_24 [0] : vector<128x128xf32> to vector<128xf32>
    %39 = vector.shape_cast %38 : vector<128xf32> to vector<1x128xf32>
    %40 = vector.broadcast %0 : f32 to vector<1x128xf32>
    %41 = arith.addf %39, %40 : vector<1x128xf32>
    %42 = arith.negf %41 : vector<1x128xf32>
    %43 = math.exp %42 : vector<1x128xf32>
    %cst_25 = arith.constant 1.000000e+00 : f32
    %44 = vector.broadcast %cst_25 : f32 to vector<1x128xf32>
    %45 = arith.addf %44, %43 : vector<1x128xf32>
    %46 = arith.divf %44, %45 : vector<1x128xf32>
    %47 = vector.extract_strided_slice %34 {offsets = [128, 0], sizes = [64, 1], strides = [1, 1]} : vector<192x1xf32> to vector<64x1xf32>
    %48 = vector.broadcast %47 : vector<64x1xf32> to vector<64x128xf32>
    %49 = arith.mulf %48, %33 : vector<64x128xf32>
    %cst_26 = arith.constant dense<0.000000e+00> : vector<128xf32>
    %50 = vector.multi_reduction <add>, %49, %cst_26 [0] : vector<64x128xf32> to vector<128xf32>
    %51 = vector.shape_cast %50 : vector<128xf32> to vector<1x128xf32>
    %52 = vector.broadcast %1 : f32 to vector<1x128xf32>
    %53 = arith.addf %51, %52 : vector<1x128xf32>
    %54 = arith.negf %53 : vector<1x128xf32>
    %55 = math.exp %54 : vector<1x128xf32>
    %cst_27 = arith.constant 1.000000e+00 : f32
    %56 = vector.broadcast %cst_27 : f32 to vector<1x128xf32>
    %57 = arith.addf %56, %55 : vector<1x128xf32>
    %58 = arith.divf %56, %57 : vector<1x128xf32>
    %c0_28 = arith.constant 0 : index
    %c0_29 = arith.constant 0 : index
    %59 = vector.load %arg12[%c0_28, %c0_29] : memref<128x1xf32, #tpu.memory_space<vmem>>, vector<128x1xf32>
    %60 = vector.extract_strided_slice %59 {offsets = [0, 0], sizes = [32, 1], strides = [1, 1]} : vector<128x1xf32> to vector<32x1xf32>
    %61 = vector.extract_strided_slice %59 {offsets = [32, 0], sizes = [32, 1], strides = [1, 1]} : vector<128x1xf32> to vector<32x1xf32>
    %62 = vector.extract_strided_slice %59 {offsets = [64, 0], sizes = [32, 1], strides = [1, 1]} : vector<128x1xf32> to vector<32x1xf32>
    %63 = vector.extract_strided_slice %59 {offsets = [96, 0], sizes = [32, 1], strides = [1, 1]} : vector<128x1xf32> to vector<32x1xf32>
    %c0_30 = arith.constant 0 : index
    %c0_31 = arith.constant 0 : index
    %64 = vector.load %arg7[%c0_30, %c0_31] : memref<32x32xf32, #tpu.memory_space<vmem>>, vector<32x32xf32>
    %cst_32 = arith.constant dense<0.000000e+00> : vector<32x128xf32>
    %65 = tpu.matmul %64, %3, %cst_32 {dimension_numbers = #tpu.dot_dimension_numbers<[1], [0], [0], [1], [0, 0, 1, 1], [], []>} : vector<32x32xf32>, vector<32x128xf32>, vector<32x128xf32> -> vector<32x128xf32>
    %66 = vector.broadcast %60 : vector<32x1xf32> to vector<32x128xf32>
    %67 = vector.broadcast %46 : vector<1x128xf32> to vector<32x128xf32>
    %68 = arith.mulf %66, %67 : vector<32x128xf32>
    %69 = arith.addf %65, %68 : vector<32x128xf32>
    %70 = vector.broadcast %61 : vector<32x1xf32> to vector<32x128xf32>
    %71 = arith.addf %69, %70 : vector<32x128xf32>
    %72 = vector.broadcast %2 : f32 to vector<1x128xf32>
    %73 = arith.mulf %72, %5 : vector<1x128xf32>
    %cst_33 = arith.constant 1.000000e+00 : f32
    %74 = arith.subf %cst_33, %2 : f32
    %75 = vector.broadcast %74 : f32 to vector<1x128xf32>
    %76 = arith.mulf %75, %58 : vector<1x128xf32>
    %77 = arith.addf %73, %76 : vector<1x128xf32>
    %78 = vector.broadcast %62 : vector<32x1xf32> to vector<32x128xf32>
    %79 = vector.broadcast %77 : vector<1x128xf32> to vector<32x128xf32>
    %80 = arith.mulf %78, %79 : vector<32x128xf32>
    %81 = arith.addf %71, %80 : vector<32x128xf32>
    %82 = vector.broadcast %63 : vector<32x1xf32> to vector<32x128xf32>
    %83 = arith.addf %81, %82 : vector<32x128xf32>
    %c0_34 = arith.constant 0 : index
    %c0_35 = arith.constant 0 : index
    %84 = vector.load %arg13[%c0_34, %c0_35] : memref<32x128xf32, #tpu.memory_space<vmem>>, vector<32x128xf32>
    tpu.vector_store %arg13[%c0_34, %c0_35], %83 {strides = array<i32>} : memref<32x128xf32, #tpu.memory_space<vmem>>, vector<32x128xf32>,
    %c0_36 = arith.constant 0 : index
    %c0_37 = arith.constant 0 : index
    %85 = vector.load %arg14[%c0_36, %c0_37] : memref<1x128xf32, #tpu.memory_space<vmem>>, vector<1x128xf32>
    tpu.vector_store %arg14[%c0_36, %c0_37], %77 {strides = array<i32>} : memref<1x128xf32, #tpu.memory_space<vmem>>, vector<1x128xf32>,
    %c0_38 = arith.constant 0 : index
    %c0_39 = arith.constant 0 : index
    %86 = vector.load %arg15[%c0_38, %c0_39] : memref<12x128xf32, #tpu.memory_space<vmem>>, vector<12x128xf32>
    tpu.vector_store %arg15[%c0_38, %c0_39], %19 {strides = array<i32>} : memref<12x128xf32, #tpu.memory_space<vmem>>, vector<12x128xf32>,
    %c0_40 = arith.constant 0 : index
    %c0_41 = arith.constant 0 : index
    %87 = vector.load %arg16[%c0_40, %c0_41] : memref<1x128xf32, #tpu.memory_space<vmem>>, vector<1x128xf32>
    tpu.vector_store %arg16[%c0_40, %c0_41], %58 {strides = array<i32>} : memref<1x128xf32, #tpu.memory_space<vmem>>, vector<1x128xf32>,
    return
  }
  func.func @transform_0(%arg0: i32) -> i32 {
    %c0_i32 = arith.constant 0 : i32
    %c0_i32_0 = arith.constant 0 : i32
    return %c0_i32 : i32
  }
  func.func @transform_1(%arg0: i32) -> (i32, i32) {
    %c0_i32 = arith.constant 0 : i32
    %c0_i32_0 = arith.constant 0 : i32
    return %c0_i32, %arg0 : i32, i32
  }
  func.func @transform_2(%arg0: i32) -> (i32, i32) {
    %c0_i32 = arith.constant 0 : i32
    %c0_i32_0 = arith.constant 0 : i32
    return %c0_i32, %arg0 : i32, i32
  }
  func.func @transform_3(%arg0: i32) -> (i32, i32) {
    %c0_i32 = arith.constant 0 : i32
    %c0_i32_0 = arith.constant 0 : i32
    return %c0_i32, %arg0 : i32, i32
  }
  func.func @transform_4(%arg0: i32) -> (i32, i32) {
    %c0_i32 = arith.constant 0 : i32
    %c0_i32_0 = arith.constant 0 : i32
    %c0_i32_1 = arith.constant 0 : i32
    return %c0_i32, %c0_i32_0 : i32, i32
  }
  func.func @transform_5(%arg0: i32) -> (i32, i32) {
    %c0_i32 = arith.constant 0 : i32
    %c0_i32_0 = arith.constant 0 : i32
    %c0_i32_1 = arith.constant 0 : i32
    return %c0_i32, %c0_i32_0 : i32, i32
  }
  func.func @transform_6(%arg0: i32) -> (i32, i32) {
    %c0_i32 = arith.constant 0 : i32
    %c0_i32_0 = arith.constant 0 : i32
    %c0_i32_1 = arith.constant 0 : i32
    return %c0_i32, %c0_i32_0 : i32, i32
  }
  func.func @transform_7(%arg0: i32) -> (i32, i32) {
    %c0_i32 = arith.constant 0 : i32
    %c0_i32_0 = arith.constant 0 : i32
    %c0_i32_1 = arith.constant 0 : i32
    return %c0_i32, %c0_i32_0 : i32, i32
  }
  func.func @transform_8(%arg0: i32) -> (i32, i32) {
    %c0_i32 = arith.constant 0 : i32
    %c0_i32_0 = arith.constant 0 : i32
    %c0_i32_1 = arith.constant 0 : i32
    return %c0_i32, %c0_i32_0 : i32, i32
  }
  func.func @transform_9(%arg0: i32) -> (i32, i32) {
    %c0_i32 = arith.constant 0 : i32
    %c0_i32_0 = arith.constant 0 : i32
    %c0_i32_1 = arith.constant 0 : i32
    return %c0_i32, %c0_i32_0 : i32, i32
  }
  func.func @transform_10(%arg0: i32) -> (i32, i32) {
    %c0_i32 = arith.constant 0 : i32
    %c0_i32_0 = arith.constant 0 : i32
    %c0_i32_1 = arith.constant 0 : i32
    return %c0_i32, %c0_i32_0 : i32, i32
  }
  func.func @transform_11(%arg0: i32) -> (i32, i32) {
    %c0_i32 = arith.constant 0 : i32
    %c0_i32_0 = arith.constant 0 : i32
    %c0_i32_1 = arith.constant 0 : i32
    return %c0_i32, %c0_i32_0 : i32, i32
  }
  func.func @transform_12(%arg0: i32) -> (i32, i32) {
    %c0_i32 = arith.constant 0 : i32
    %c0_i32_0 = arith.constant 0 : i32
    return %c0_i32, %arg0 : i32, i32
  }
  func.func @transform_13(%arg0: i32) -> (i32, i32) {
    %c0_i32 = arith.constant 0 : i32
    %c0_i32_0 = arith.constant 0 : i32
    return %c0_i32, %arg0 : i32, i32
  }
  func.func @transform_14(%arg0: i32) -> (i32, i32) {
    %c0_i32 = arith.constant 0 : i32
    %c0_i32_0 = arith.constant 0 : i32
    return %c0_i32, %arg0 : i32, i32
  }
  func.func @transform_15(%arg0: i32) -> (i32, i32) {
    %c0_i32 = arith.constant 0 : i32
    %c0_i32_0 = arith.constant 0 : i32
    return %c0_i32, %arg0 : i32, i32
  }
}

</mosaic_0001>

<llo_original>
// kernel: tpu_custom_call.1
$region0: #{tpu_custom_call.1}
  #allocation0 [shape = 'u32[]', space=smem, size = 0x4, offset = 0x4, fixed_abs, tag = 'smem constant byte address 0x4 - core index']
  #allocation1 [shape = 'u32[72,128]{1,0:T(1,128)}', space=vmem, size = 0x9000, scoped, tag = 'internal scratch']
  %s0 = inlined_call_operand.vmem [shape: f32[3], index: 0, kind: input, shape index: {}]
  %s1 = inlined_call_operand.vmem [shape: f32[32,200], index: 1, kind: input, shape index: {}]
  %s2 = inlined_call_operand.vmem [shape: f32[12,200], index: 2, kind: input, shape index: {}]
  %s3 = inlined_call_operand.vmem [shape: f32[1,200], index: 3, kind: input, shape index: {}]
  %s4 = inlined_call_operand.vmem [shape: f32[12,32], index: 4, kind: input, shape index: {}]
  %s5 = inlined_call_operand.vmem [shape: f32[12,1], index: 5, kind: input, shape index: {}]
  %s6 = inlined_call_operand.vmem [shape: f32[32,32], index: 6, kind: input, shape index: {}]
  %s7 = inlined_call_operand.vmem [shape: f32[192,12], index: 7, kind: input, shape index: {}]
  %s8 = inlined_call_operand.vmem [shape: f32[192,1], index: 8, kind: input, shape index: {}]
  %s9 = inlined_call_operand.vmem [shape: f32[192,1], index: 9, kind: input, shape index: {}]
  %s10 = inlined_call_operand.vmem [shape: f32[64,12], index: 10, kind: input, shape index: {}]
  %s11 = inlined_call_operand.vmem [shape: f32[128,1], index: 11, kind: input, shape index: {}]
  %s12 = inlined_call_operand.hbm [shape: f32[32,200], index: 12, kind: output, shape index: {0}]
  %s13 = inlined_call_operand.hbm [shape: f32[1,200], index: 13, kind: output, shape index: {1}]
  %s14 = inlined_call_operand.hbm [shape: f32[12,200], index: 14, kind: output, shape index: {2}]
  %s15 = inlined_call_operand.hbm [shape: f32[1,200], index: 15, kind: output, shape index: {3}]
  %16 = xla_tuple %s12, %s13, %s14, %s15
  %s17 = sld [smem:[#allocation0]]
  $region185: #{tpu_custom_call.1} parent=0
    _
  %s19 = ssub.s32 1, %s17
  %s20 = scalar_select 0, %s19, %s17
  $region1: #{tpu_custom_call.1} parent=0
    #allocation2 [shape = 'u8[512]{0}', space=smem, size = 0x200, scoped, tag = 'input window, operand 0, single buffered']
    #allocation3 [shape = 's32[2]{0}', space=sflag, size = 0x8, scoped, tag = 'scoped memory for tpu_custom_call.1']
    #allocation4 [shape = 's32[2]{0}', space=sflag, size = 0x8, scoped, tag = 'scoped memory for tpu_custom_call.1']
    #allocation5 [shape = 'u8[32768]{0}', space=vmem, size = 0x8000, scoped, tag = 'input window, operand 1']
    #allocation6 [shape = 'u8[16384]{0}', space=vmem, size = 0x4000, scoped, tag = 'input window, operand 2']
    #allocation7 [shape = 'u8[32768]{0}', space=vmem, size = 0x8000, scoped, tag = 'output window, operand 0']
    #allocation8 [shape = 'u8[1024]{0}', space=vmem, size = 0x400, scoped, tag = 'output window, operand 1']
    #allocation9 [shape = 's32[2]{0}', space=sflag, size = 0x8, scoped, tag = 'scoped memory for tpu_custom_call.1']
    #allocation10 [shape = 'u8[16384]{0}', space=vmem, size = 0x4000, scoped, tag = 'output window, operand 2']
    #allocation11 [shape = 'u8[1024]{0}', space=vmem, size = 0x400, scoped, tag = 'output window, operand 3']
    #allocation12 [shape = 's32[2]{0}', space=sflag, size = 0x8, scoped, tag = 'scoped memory for tpu_custom_call.1']
    %21 = vsyncpa [#allocation4], 0
    %22 = vsyncpa [#allocation3], 0
    %s23 = scalar_lea.sflag [#allocation3], 1
    %24 = vsyncpa %s23, 0
    %25 = vsyncpa [#allocation9], 0
    %s26 = scalar_lea.sflag [#allocation9], 1
    %27 = vsyncpa %s26, 0
    %28 = vsyncpa [#allocation12], 0
    %s29 = scalar_lea.sflag [#allocation12], 1
    %30 = vsyncpa %s29, 0
    loop: start=0, step=1, limit=4
    $region2: #{tpu_custom_call.1} parent=1 // loop_pre_header
      _
    $region3: #{tpu_custom_call.1} parent=1 // loop_header
      %s32 = sphi 0, %s36
      %p33 = scmp.ge.s32.totalorder %s32, 4
      %s40 = sphi 0, %s40
      %s42 = sphi 0, %s40
      %s43 = sphi 0, %s42
      %s57 = sphi 0, %s43
      %s63 = sphi 0, %s65
      %s66 = sphi 0, %s63
      %s67 = sphi 0, %s66
      %s83 = sphi 0, %s67
      %s89 = sphi 0, %s91
      %s92 = sphi 0, %s89
      %s93 = sphi 0, %s92
      %s109 = sphi 0, %s93
      %s115 = sphi 0, %s117
      %s118 = sphi 0, %s115
      %s119 = sphi 0, %s118
      %s135 = sphi 0, %s119
      %s139 = sphi 0, %s139
      %s141 = sphi 0, %s139
      %s142 = sphi 0, %s141
      %s156 = sphi 0, %s142
      %s160 = sphi 0, %s160
      %s162 = sphi 0, %s160
      %s163 = sphi 0, %s162
      %s177 = sphi 0, %s163
      %s181 = sphi 0, %s181
      %s183 = sphi 0, %s181
      %s184 = sphi 0, %s183
      %s198 = sphi 0, %s184
      %s202 = sphi 0, %s202
      %s204 = sphi 0, %s202
      %s205 = sphi 0, %s204
      %s219 = sphi 0, %s205
      %s223 = sphi 0, %s223
      %s225 = sphi 0, %s223
      %s226 = sphi 0, %s225
      %s240 = sphi 0, %s226
      %s244 = sphi 0, %s244
      %s246 = sphi 0, %s244
      %s247 = sphi 0, %s246
      %s261 = sphi 0, %s247
      %s265 = sphi 0, %s265
      %s267 = sphi 0, %s265
      %s268 = sphi 0, %s267
      %s282 = sphi 0, %s268
      %s286 = sphi 0, %s286
      %s288 = sphi 0, %s286
      %s289 = sphi 0, %s288
      %s303 = sphi 0, %s289
      %s309 = sphi 0, %s311
      %s312 = sphi 0, %s309
      %s313 = sphi 0, %s312
      %s329 = sphi 0, %s313
      %s335 = sphi 0, %s337
      %s338 = sphi 0, %s335
      %s339 = sphi 0, %s338
      %s355 = sphi 0, %s339
      %s361 = sphi 0, %s363
      %s364 = sphi 0, %s361
      %s365 = sphi 0, %s364
      %s381 = sphi 0, %s365
      %s387 = sphi 0, %s389
      %s390 = sphi 0, %s387
      %s391 = sphi 0, %s390
      %s407 = sphi 0, %s391
    $region4: #{tpu_custom_call.1} parent=1 // loop_header_branch
      %35 = sbr.rel (%p33) target = $region8
    $region5: #{tpu_custom_call.1} parent=1 // loop_body
      %s37 = ssub.s32 %s32, 1
      %s38 = ssub.s32 %s32, 2
      %s39 = sadd.s32 %s32, 1
      %s41 = sadd.s32 %s40, 1
      %p44 = scmp.eq.s32.totalorder %s32, 1
      %p45 = scmp.ne.s32.totalorder %s40, %s42
      %p46 = scmp.eq.s32.totalorder %s32, 0
      %p47 = por %p45, %p46
      %p48 = scmp.ne.s32.totalorder %s40, %s42
      %p49 = scmp.eq.s32.totalorder %s37, 1
      %p50 = por %p48, %p49
      %p51 = scmp.ne.s32.totalorder %s42, %s43
      %p52 = scmp.eq.s32.totalorder %s37, 0
      %p53 = por %p51, %p52
      %p54 = scmp.ne.s32.totalorder %s42, %s43
      %p55 = scmp.eq.s32.totalorder %s38, 1
      %p56 = por %p54, %p55
      %p58 = scmp.ne.s32.totalorder %s43, %s57
      %p59 = scmp.eq.s32.totalorder %s38, 0
      %p60 = por %p58, %p59
      %s61 = ssub.s32 %s32, %s39
      %p62 = scmp.eq.s32.totalorder %s61, 0
      %s64 = sadd.s32 %s63, 1
      %s65 = scalar_select %p62, %s63, %s64
      %p68 = pneg %p62
      %p69 = scmp.eq.s32.totalorder %s32, 1
      %p70 = por %p68, %p69
      %p71 = scmp.ne.s32.totalorder %s63, %s66
      %p72 = scmp.eq.s32.totalorder %s32, 0
      %p73 = por %p71, %p72
      %p74 = scmp.ne.s32.totalorder %s63, %s66
      %p75 = scmp.eq.s32.totalorder %s37, 1
      %p76 = por %p74, %p75
      %p77 = scmp.ne.s32.totalorder %s66, %s67
      %p78 = scmp.eq.s32.totalorder %s37, 0
      %p79 = por %p77, %p78
      %p80 = scmp.ne.s32.totalorder %s66, %s67
      %p81 = scmp.eq.s32.totalorder %s38, 1
      %p82 = por %p80, %p81
      %p84 = scmp.ne.s32.totalorder %s67, %s83
      %p85 = scmp.eq.s32.totalorder %s38, 0
      %p86 = por %p84, %p85
      %s87 = ssub.s32 %s32, %s39
      %p88 = scmp.eq.s32.totalorder %s87, 0
      %s90 = sadd.s32 %s89, 1
      %s91 = scalar_select %p88, %s89, %s90
      %p94 = pneg %p88
      %p95 = scmp.eq.s32.totalorder %s32, 1
      %p96 = por %p94, %p95
      %p97 = scmp.ne.s32.totalorder %s89, %s92
      %p98 = scmp.eq.s32.totalorder %s32, 0
      %p99 = por %p97, %p98
      %p100 = scmp.ne.s32.totalorder %s89, %s92
      %p101 = scmp.eq.s32.totalorder %s37, 1
      %p102 = por %p100, %p101
      %p103 = scmp.ne.s32.totalorder %s92, %s93
      %p104 = scmp.eq.s32.totalorder %s37, 0
      %p105 = por %p103, %p104
      %p106 = scmp.ne.s32.totalorder %s92, %s93
      %p107 = scmp.eq.s32.totalorder %s38, 1
      %p108 = por %p106, %p107
      %p110 = scmp.ne.s32.totalorder %s93, %s109
      %p111 = scmp.eq.s32.totalorder %s38, 0
      %p112 = por %p110, %p111
      %s113 = ssub.s32 %s32, %s39
      %p114 = scmp.eq.s32.totalorder %s113, 0
      %s116 = sadd.s32 %s115, 1
      %s117 = scalar_select %p114, %s115, %s116
      %p120 = pneg %p114
      %p121 = scmp.eq.s32.totalorder %s32, 1
      %p122 = por %p120, %p121
      %p123 = scmp.ne.s32.totalorder %s115, %s118
      %p124 = scmp.eq.s32.totalorder %s32, 0
      %p125 = por %p123, %p124
      %p126 = scmp.ne.s32.totalorder %s115, %s118
      %p127 = scmp.eq.s32.totalorder %s37, 1
      %p128 = por %p126, %p127
      %p129 = scmp.ne.s32.totalorder %s118, %s119
      %p130 = scmp.eq.s32.totalorder %s37, 0
      %p131 = por %p129, %p130
      %p132 = scmp.ne.s32.totalorder %s118, %s119
      %p133 = scmp.eq.s32.totalorder %s38, 1
      %p134 = por %p132, %p133
      %p136 = scmp.ne.s32.totalorder %s119, %s135
      %p137 = scmp.eq.s32.totalorder %s38, 0
      %p138 = por %p136, %p137
      %s140 = sadd.s32 %s139, 1
      %p143 = scmp.eq.s32.totalorder %s32, 1
      %p144 = scmp.ne.s32.totalorder %s139, %s141
      %p145 = scmp.eq.s32.totalorder %s32, 0
      %p146 = por %p144, %p145
      %p147 = scmp.ne.s32.totalorder %s139, %s141
      %p148 = scmp.eq.s32.totalorder %s37, 1
      %p149 = por %p147, %p148
      %p150 = scmp.ne.s32.totalorder %s141, %s142
      %p151 = scmp.eq.s32.totalorder %s37, 0
      %p152 = por %p150, %p151
      %p153 = scmp.ne.s32.totalorder %s141, %s142
      %p154 = scmp.eq.s32.totalorder %s38, 1
      %p155 = por %p153, %p154
      %p157 = scmp.ne.s32.totalorder %s142, %s156
      %p158 = scmp.eq.s32.totalorder %s38, 0
      %p159 = por %p157, %p158
      %s161 = sadd.s32 %s160, 1
      %p164 = scmp.eq.s32.totalorder %s32, 1
      %p165 = scmp.ne.s32.totalorder %s160, %s162
      %p166 = scmp.eq.s32.totalorder %s32, 0
      %p167 = por %p165, %p166
      %p168 = scmp.ne.s32.totalorder %s160, %s162
      %p169 = scmp.eq.s32.totalorder %s37, 1
      %p170 = por %p168, %p169
      %p171 = scmp.ne.s32.totalorder %s162, %s163
      %p172 = scmp.eq.s32.totalorder %s37, 0
      %p173 = por %p171, %p172
      %p174 = scmp.ne.s32.totalorder %s162, %s163
      %p175 = scmp.eq.s32.totalorder %s38, 1
      %p176 = por %p174, %p175
      %p178 = scmp.ne.s32.totalorder %s163, %s177
      %p179 = scmp.eq.s32.totalorder %s38, 0
      %p180 = por %p178, %p179
      %s182 = sadd.s32 %s181, 1
      %p185 = scmp.eq.s32.totalorder %s32, 1
      %p186 = scmp.ne.s32.totalorder %s181, %s183
      %p187 = scmp.eq.s32.totalorder %s32, 0
      %p188 = por %p186, %p187
      %p189 = scmp.ne.s32.totalorder %s181, %s183
      %p190 = scmp.eq.s32.totalorder %s37, 1
      %p191 = por %p189, %p190
      %p192 = scmp.ne.s32.totalorder %s183, %s184
      %p193 = scmp.eq.s32.totalorder %s37, 0
      %p194 = por %p192, %p193
      %p195 = scmp.ne.s32.totalorder %s183, %s184
      %p196 = scmp.eq.s32.totalorder %s38, 1
      %p197 = por %p195, %p196
      %p199 = scmp.ne.s32.totalorder %s184, %s198
      %p200 = scmp.eq.s32.totalorder %s38, 0
      %p201 = por %p199, %p200
      %s203 = sadd.s32 %s202, 1
      %p206 = scmp.eq.s32.totalorder %s32, 1
      %p207 = scmp.ne.s32.totalorder %s202, %s204
      %p208 = scmp.eq.s32.totalorder %s32, 0
      %p209 = por %p207, %p208
      %p210 = scmp.ne.s32.totalorder %s202, %s204
      %p211 = scmp.eq.s32.totalorder %s37, 1
      %p212 = por %p210, %p211
      %p213 = scmp.ne.s32.totalorder %s204, %s205
      %p214 = scmp.eq.s32.totalorder %s37, 0
      %p215 = por %p213, %p214
      %p216 = scmp.ne.s32.totalorder %s204, %s205
      %p217 = scmp.eq.s32.totalorder %s38, 1
      %p218 = por %p216, %p217
      %p220 = scmp.ne.s32.totalorder %s205, %s219
      %p221 = scmp.eq.s32.totalorder %s38, 0
      %p222 = por %p220, %p221
      %s224 = sadd.s32 %s223, 1
      %p227 = scmp.eq.s32.totalorder %s32, 1
      %p228 = scmp.ne.s32.totalorder %s223, %s225
      %p229 = scmp.eq.s32.totalorder %s32, 0
      %p230 = por %p228, %p229
      %p231 = scmp.ne.s32.totalorder %s223, %s225
      %p232 = scmp.eq.s32.totalorder %s37, 1
      %p233 = por %p231, %p232
      %p234 = scmp.ne.s32.totalorder %s225, %s226
      %p235 = scmp.eq.s32.totalorder %s37, 0
      %p236 = por %p234, %p235
      %p237 = scmp.ne.s32.totalorder %s225, %s226
      %p238 = scmp.eq.s32.totalorder %s38, 1
      %p239 = por %p237, %p238
      %p241 = scmp.ne.s32.totalorder %s226, %s240
      %p242 = scmp.eq.s32.totalorder %s38, 0
      %p243 = por %p241, %p242
      %s245 = sadd.s32 %s244, 1
      %p248 = scmp.eq.s32.totalorder %s32, 1
      %p249 = scmp.ne.s32.totalorder %s244, %s246
      %p250 = scmp.eq.s32.totalorder %s32, 0
      %p251 = por %p249, %p250
      %p252 = scmp.ne.s32.totalorder %s244, %s246
      %p253 = scmp.eq.s32.totalorder %s37, 1
      %p254 = por %p252, %p253
      %p255 = scmp.ne.s32.totalorder %s246, %s247
      %p256 = scmp.eq.s32.totalorder %s37, 0
      %p257 = por %p255, %p256
      %p258 = scmp.ne.s32.totalorder %s246, %s247
      %p259 = scmp.eq.s32.totalorder %s38, 1
      %p260 = por %p258, %p259
      %p262 = scmp.ne.s32.totalorder %s247, %s261
      %p263 = scmp.eq.s32.totalorder %s38, 0
      %p264 = por %p262, %p263
      %s266 = sadd.s32 %s265, 1
      %p269 = scmp.eq.s32.totalorder %s32, 1
      %p270 = scmp.ne.s32.totalorder %s265, %s267
      %p271 = scmp.eq.s32.totalorder %s32, 0
      %p272 = por %p270, %p271
      %p273 = scmp.ne.s32.totalorder %s265, %s267
      %p274 = scmp.eq.s32.totalorder %s37, 1
      %p275 = por %p273, %p274
      %p276 = scmp.ne.s32.totalorder %s267, %s268
      %p277 = scmp.eq.s32.totalorder %s37, 0
      %p278 = por %p276, %p277
      %p279 = scmp.ne.s32.totalorder %s267, %s268
      %p280 = scmp.eq.s32.totalorder %s38, 1
      %p281 = por %p279, %p280
      %p283 = scmp.ne.s32.totalorder %s268, %s282
      %p284 = scmp.eq.s32.totalorder %s38, 0
      %p285 = por %p283, %p284
      %s287 = sadd.s32 %s286, 1
      %p290 = scmp.eq.s32.totalorder %s32, 1
      %p291 = scmp.ne.s32.totalorder %s286, %s288
      %p292 = scmp.eq.s32.totalorder %s32, 0
      %p293 = por %p291, %p292
      %p294 = scmp.ne.s32.totalorder %s286, %s288
      %p295 = scmp.eq.s32.totalorder %s37, 1
      %p296 = por %p294, %p295
      %p297 = scmp.ne.s32.totalorder %s288, %s289
      %p298 = scmp.eq.s32.totalorder %s37, 0
      %p299 = por %p297, %p298
      %p300 = scmp.ne.s32.totalorder %s288, %s289
      %p301 = scmp.eq.s32.totalorder %s38, 1
      %p302 = por %p300, %p301
      %p304 = scmp.ne.s32.totalorder %s289, %s303
      %p305 = scmp.eq.s32.totalorder %s38, 0
      %p306 = por %p304, %p305
      %s307 = ssub.s32 %s32, %s39
      %p308 = scmp.eq.s32.totalorder %s307, 0
      %s310 = sadd.s32 %s309, 1
      %s311 = scalar_select %p308, %s309, %s310
      %p314 = pneg %p308
      %p315 = scmp.eq.s32.totalorder %s32, 1
      %p316 = por %p314, %p315
      %p317 = scmp.ne.s32.totalorder %s309, %s312
      %p318 = scmp.eq.s32.totalorder %s32, 0
      %p319 = por %p317, %p318
      %p320 = scmp.ne.s32.totalorder %s309, %s312
      %p321 = scmp.eq.s32.totalorder %s37, 1
      %p322 = por %p320, %p321
      %p323 = scmp.ne.s32.totalorder %s312, %s313
      %p324 = scmp.eq.s32.totalorder %s37, 0
      %p325 = por %p323, %p324
      %p326 = scmp.ne.s32.totalorder %s312, %s313
      %p327 = scmp.eq.s32.totalorder %s38, 1
      %p328 = por %p326, %p327
      %p330 = scmp.ne.s32.totalorder %s313, %s329
      %p331 = scmp.eq.s32.totalorder %s38, 0
      %p332 = por %p330, %p331
      %s333 = ssub.s32 %s32, %s39
      %p334 = scmp.eq.s32.totalorder %s333, 0
      %s336 = sadd.s32 %s335, 1
      %s337 = scalar_select %p334, %s335, %s336
      %p340 = pneg %p334
      %p341 = scmp.eq.s32.totalorder %s32, 1
      %p342 = por %p340, %p341
      %p343 = scmp.ne.s32.totalorder %s335, %s338
      %p344 = scmp.eq.s32.totalorder %s32, 0
      %p345 = por %p343, %p344
      %p346 = scmp.ne.s32.totalorder %s335, %s338
      %p347 = scmp.eq.s32.totalorder %s37, 1
      %p348 = por %p346, %p347
      %p349 = scmp.ne.s32.totalorder %s338, %s339
      %p350 = scmp.eq.s32.totalorder %s37, 0
      %p351 = por %p349, %p350
      %p352 = scmp.ne.s32.totalorder %s338, %s339
      %p353 = scmp.eq.s32.totalorder %s38, 1
      %p354 = por %p352, %p353
      %p356 = scmp.ne.s32.totalorder %s339, %s355
      %p357 = scmp.eq.s32.totalorder %s38, 0
      %p358 = por %p356, %p357
      %s359 = ssub.s32 %s32, %s39
      %p360 = scmp.eq.s32.totalorder %s359, 0
      %s362 = sadd.s32 %s361, 1
      %s363 = scalar_select %p360, %s361, %s362
      %p366 = pneg %p360
      %p367 = scmp.eq.s32.totalorder %s32, 1
      %p368 = por %p366, %p367
      %p369 = scmp.ne.s32.totalorder %s361, %s364
      %p370 = scmp.eq.s32.totalorder %s32, 0
      %p371 = por %p369, %p370
      %p372 = scmp.ne.s32.totalorder %s361, %s364
      %p373 = scmp.eq.s32.totalorder %s37, 1
      %p374 = por %p372, %p373
      %p375 = scmp.ne.s32.totalorder %s364, %s365
      %p376 = scmp.eq.s32.totalorder %s37, 0
      %p377 = por %p375, %p376
      %p378 = scmp.ne.s32.totalorder %s364, %s365
      %p379 = scmp.eq.s32.totalorder %s38, 1
      %p380 = por %p378, %p379
      %p382 = scmp.ne.s32.totalorder %s365, %s381
      %p383 = scmp.eq.s32.totalorder %s38, 0
      %p384 = por %p382, %p383
      %s385 = ssub.s32 %s32, %s39
      %p386 = scmp.eq.s32.totalorder %s385, 0
      %s388 = sadd.s32 %s387, 1
      %s389 = scalar_select %p386, %s387, %s388
      %p392 = pneg %p386
      %p393 = scmp.eq.s32.totalorder %s32, 1
      %p394 = por %p392, %p393
      %p395 = scmp.ne.s32.totalorder %s387, %s390
      %p396 = scmp.eq.s32.totalorder %s32, 0
      %p397 = por %p395, %p396
      %p398 = scmp.ne.s32.totalorder %s387, %s390
      %p399 = scmp.eq.s32.totalorder %s37, 1
      %p400 = por %p398, %p399
      %p401 = scmp.ne.s32.totalorder %s390, %s391
      %p402 = scmp.eq.s32.totalorder %s37, 0
      %p403 = por %p401, %p402
      %p404 = scmp.ne.s32.totalorder %s390, %s391
      %p405 = scmp.eq.s32.totalorder %s38, 1
      %p406 = por %p404, %p405
      %p408 = scmp.ne.s32.totalorder %s391, %s407
      %p409 = scmp.eq.s32.totalorder %s38, 0
      %p410 = por %p408, %p409
      %p411 = scmp.le.s32.totalorder 1, %s32
      %p412 = scmp.lt.s32.totalorder %s32, 3
      %p413 = pnand %p411, %p412
      %p414 = pneg %p413
      // Predicated region
      $region9: #{tpu_custom_call.1} parent=5 // pred_check
        _
      $region10: #{tpu_custom_call.1} parent=5 // pred_check_branch
        %416 = sbr.rel (%p413) target = $region12
      $region11: #{tpu_custom_call.1} parent=5 // pred_region
        %s417 = ssub.s32 %s32, 1
        // Predicated region
        $region13: #{tpu_custom_call.1} parent=11 // pred_check
          %p418 = pneg %p53
        $region14: #{tpu_custom_call.1} parent=11 // pred_check_branch
          %420 = sbr.rel (%p418) target = $region16
        $region15: #{tpu_custom_call.1} parent=11 // pred_region
          %422 = vsyncadd [#allocation4], 0
          %s424 = sshll.u32 %s0, 4
          %s425 = int_to_ptr.vmem [resolvable:$true] %s424
          %427 = dma.vmem_to_smem %s425, 16, [#allocation2], [#allocation4]
        $region16: #{tpu_custom_call.1} parent=11 // pred_fallthru
          _
        // Predicated region
        $region17: #{tpu_custom_call.1} parent=11 // pred_check
          %p428 = pneg %p152
        $region18: #{tpu_custom_call.1} parent=11 // pred_check_branch
          %430 = sbr.rel (%p428) target = $region20
        $region19: #{tpu_custom_call.1} parent=11 // pred_region
          _
        $region20: #{tpu_custom_call.1} parent=11 // pred_fallthru
          _
        // Predicated region
        $region21: #{tpu_custom_call.1} parent=11 // pred_check
          %p431 = pneg %p173
        $region22: #{tpu_custom_call.1} parent=11 // pred_check_branch
          %433 = sbr.rel (%p431) target = $region24
        $region23: #{tpu_custom_call.1} parent=11 // pred_region
          _
        $region24: #{tpu_custom_call.1} parent=11 // pred_fallthru
          _
        // Predicated region
        $region25: #{tpu_custom_call.1} parent=11 // pred_check
          %p434 = pneg %p194
        $region26: #{tpu_custom_call.1} parent=11 // pred_check_branch
          %436 = sbr.rel (%p434) target = $region28
        $region27: #{tpu_custom_call.1} parent=11 // pred_region
          _
        $region28: #{tpu_custom_call.1} parent=11 // pred_fallthru
          _
        // Predicated region
        $region29: #{tpu_custom_call.1} parent=11 // pred_check
          %p437 = pneg %p215
        $region30: #{tpu_custom_call.1} parent=11 // pred_check_branch
          %439 = sbr.rel (%p437) target = $region32
        $region31: #{tpu_custom_call.1} parent=11 // pred_region
          _
        $region32: #{tpu_custom_call.1} parent=11 // pred_fallthru
          _
        // Predicated region
        $region33: #{tpu_custom_call.1} parent=11 // pred_check
          %p440 = pneg %p236
        $region34: #{tpu_custom_call.1} parent=11 // pred_check_branch
          %442 = sbr.rel (%p440) target = $region36
        $region35: #{tpu_custom_call.1} parent=11 // pred_region
          _
        $region36: #{tpu_custom_call.1} parent=11 // pred_fallthru
          _
        // Predicated region
        $region37: #{tpu_custom_call.1} parent=11 // pred_check
          %p443 = pneg %p257
        $region38: #{tpu_custom_call.1} parent=11 // pred_check_branch
          %445 = sbr.rel (%p443) target = $region40
        $region39: #{tpu_custom_call.1} parent=11 // pred_region
          _
        $region40: #{tpu_custom_call.1} parent=11 // pred_fallthru
          _
        // Predicated region
        $region41: #{tpu_custom_call.1} parent=11 // pred_check
          %p446 = pneg %p278
        $region42: #{tpu_custom_call.1} parent=11 // pred_check_branch
          %448 = sbr.rel (%p446) target = $region44
        $region43: #{tpu_custom_call.1} parent=11 // pred_region
          _
        $region44: #{tpu_custom_call.1} parent=11 // pred_fallthru
          _
        // Predicated region
        $region45: #{tpu_custom_call.1} parent=11 // pred_check
          %p449 = pneg %p299
        $region46: #{tpu_custom_call.1} parent=11 // pred_check_branch
          %451 = sbr.rel (%p449) target = $region48
        $region47: #{tpu_custom_call.1} parent=11 // pred_region
          _
        $region48: #{tpu_custom_call.1} parent=11 // pred_fallthru
          _
      $region12: #{tpu_custom_call.1} parent=5 // pred_fallthru
        _
      %p452 = scmp.lt.s32.totalorder %s32, 2
      // Predicated region
      $region49: #{tpu_custom_call.1} parent=5 // pred_check
        %p453 = pneg %p452
      $region50: #{tpu_custom_call.1} parent=5 // pred_check_branch
        %455 = sbr.rel (%p453) target = $region52
      $region51: #{tpu_custom_call.1} parent=5 // pred_region
        // Predicated region
        $region53: #{tpu_custom_call.1} parent=51 // pred_check
          %p456 = pneg %p73
        $region54: #{tpu_custom_call.1} parent=51 // pred_check_branch
          %458 = sbr.rel (%p456) target = $region56
        $region55: #{tpu_custom_call.1} parent=51 // pred_region
          %s459 = sand.u32 %s63, 1
          %s460 = sand.u32 %s63, 1
          %s461 = smul.addr %s460, 32
          %s462 = scalar_lea.vmem [#allocation5], %s461
          %s463 = smul.addr %s32, 8
          %s464 = scalar_lea.vmem %s1, %s463
          // Predicated region
          $region57: #{tpu_custom_call.1} parent=55 // pred_check
            _
          $region58: #{tpu_custom_call.1} parent=55 // pred_check_branch
            %466 = sbr.rel (0) target = $region60
          $region59: #{tpu_custom_call.1} parent=55 // pred_region
            // Predicated region
            $region61: #{tpu_custom_call.1} parent=59 // pred_check
              _
            $region62: #{tpu_custom_call.1} parent=59 // pred_check_branch
              %468 = sbr.rel (0) target = $region64
            $region63: #{tpu_custom_call.1} parent=59 // pred_region
              // Predicated region
              $region76: #{tpu_custom_call.1} parent=63 // pred_check
                _
              $region77: #{tpu_custom_call.1} parent=63 // pred_check_branch
                %490 = sbr.rel (0) target = $region79
              $region78: #{tpu_custom_call.1} parent=63 // pred_region
                loop: start=0, step=1, limit=1
                $region80: #{tpu_custom_call.1} parent=78 // loop_pre_header
                  _
                $region81: #{tpu_custom_call.1} parent=78 // loop_header
                  %s492 = sphi 0, %s496
                  %p493 = scmp.ge.s32.totalorder %s492, 1
                  %s497 = sphi %s464, %s464
                  %s498 = sphi %s462, %s462
                $region82: #{tpu_custom_call.1} parent=78 // loop_header_branch
                  %495 = sbr.rel (%p493) target = $region86
                $region83: #{tpu_custom_call.1} parent=78 // loop_body
                  %v499 = vld [vmem:[%s497] sm:$0xff]
                  %500 = vst [vmem:[%s498] sm:$0xff] %v499
                  %v501 = vld [vmem:[%s497 + $0x10] sm:$0xff]
                  %502 = vst [vmem:[%s498 + $0x8] sm:$0xff] %v501
                  %v503 = vld [vmem:[%s497 + $0x20] sm:$0xff]
                  %504 = vst [vmem:[%s498 + $0x10] sm:$0xff] %v503
                  %v505 = vld [vmem:[%s497 + $0x30] sm:$0xff]
                  %506 = vst [vmem:[%s498 + $0x18] sm:$0xff] %v505
                $region84: #{tpu_custom_call.1} parent=78 // loop_footer
                  %s496 = sadd.s32 1, %s492
                $region85: #{tpu_custom_call.1} parent=78 // loop_footer_branch
                  %491 = sbr.rel target = $region81
                $region86: #{tpu_custom_call.1} parent=78 // loop_exit
                  _
              $region79: #{tpu_custom_call.1} parent=63 // pred_fallthru
                _
              // Predicated region
              $region87: #{tpu_custom_call.1} parent=63 // pred_check
                _
              $region88: #{tpu_custom_call.1} parent=63 // pred_check_branch
                %508 = sbr.rel target = $region90
              $region89: #{tpu_custom_call.1} parent=63 // pred_region
                _
              $region90: #{tpu_custom_call.1} parent=63 // pred_fallthru
                _
            $region64: #{tpu_custom_call.1} parent=59 // pred_fallthru
              _
            // Predicated region
            $region65: #{tpu_custom_call.1} parent=59 // pred_check
              _
            $region66: #{tpu_custom_call.1} parent=59 // pred_check_branch
              %470 = sbr.rel target = $region68
            $region67: #{tpu_custom_call.1} parent=59 // pred_region
              %s472 = ssub.s32 256, 1
              loop: start=0, step=1, limit=1
              $region69: #{tpu_custom_call.1} parent=67 // loop_pre_header
                _
              $region70: #{tpu_custom_call.1} parent=67 // loop_header
                %s474 = sphi 0, %s478
                %p475 = scmp.ge.s32.totalorder %s474, 1
                %s479 = sphi %s464, %s464
                %s480 = sphi %s462, %s462
              $region71: #{tpu_custom_call.1} parent=67 // loop_header_branch
                %477 = sbr.rel (%p475) target = $region75
              $region72: #{tpu_custom_call.1} parent=67 // loop_body
                %v481 = vld [vmem:[%s479] sm:%s472]
                %482 = vst [vmem:[%s480] sm:%s472] %v481
                %v483 = vld [vmem:[%s479 + $0x10] sm:%s472]
                %484 = vst [vmem:[%s480 + $0x8] sm:%s472] %v483
                %v485 = vld [vmem:[%s479 + $0x20] sm:%s472]
                %486 = vst [vmem:[%s480 + $0x10] sm:%s472] %v485
                %v487 = vld [vmem:[%s479 + $0x30] sm:%s472]
                %488 = vst [vmem:[%s480 + $0x18] sm:%s472] %v487
              $region73: #{tpu_custom_call.1} parent=67 // loop_footer
                %s478 = sadd.s32 1, %s474
              $region74: #{tpu_custom_call.1} parent=67 // loop_footer_branch
                %473 = sbr.rel target = $region70
              $region75: #{tpu_custom_call.1} parent=67 // loop_exit
                _
            $region68: #{tpu_custom_call.1} parent=59 // pred_fallthru
              _
          $region60: #{tpu_custom_call.1} parent=55 // pred_fallthru
            _
          %509 = vnop
        $region56: #{tpu_custom_call.1} parent=51 // pred_fallthru
          _
        // Predicated region
        $region91: #{tpu_custom_call.1} parent=51 // pred_check
          %p510 = pneg %p99
        $region92: #{tpu_custom_call.1} parent=51 // pred_check_branch
          %512 = sbr.rel (%p510) target = $region94
        $region93: #{tpu_custom_call.1} parent=51 // pred_region
          %s513 = sand.u32 %s89, 1
          %s514 = sand.u32 %s89, 1
          %s515 = smul.addr %s514, 16
          %s516 = scalar_lea.vmem [#allocation6], %s515
          %s517 = smul.addr %s32, 8
          %s518 = scalar_lea.vmem %s2, %s517
          // Predicated region
          $region95: #{tpu_custom_call.1} parent=93 // pred_check
            _
          $region96: #{tpu_custom_call.1} parent=93 // pred_check_branch
            %520 = sbr.rel (0) target = $region98
          $region97: #{tpu_custom_call.1} parent=93 // pred_region
            // Predicated region
            $region99: #{tpu_custom_call.1} parent=97 // pred_check
              _
            $region100: #{tpu_custom_call.1} parent=97 // pred_check_branch
              %522 = sbr.rel (0) target = $region102
            $region101: #{tpu_custom_call.1} parent=97 // pred_region
              // Predicated region
              $region114: #{tpu_custom_call.1} parent=101 // pred_check
                _
              $region115: #{tpu_custom_call.1} parent=101 // pred_check_branch
                %540 = sbr.rel (0) target = $region117
              $region116: #{tpu_custom_call.1} parent=101 // pred_region
                loop: start=0, step=1, limit=1
                $region118: #{tpu_custom_call.1} parent=116 // loop_pre_header
                  _
                $region119: #{tpu_custom_call.1} parent=116 // loop_header
                  %s542 = sphi 0, %s546
                  %p543 = scmp.ge.s32.totalorder %s542, 1
                  %s547 = sphi %s518, %s518
                  %s548 = sphi %s516, %s516
                $region120: #{tpu_custom_call.1} parent=116 // loop_header_branch
                  %545 = sbr.rel (%p543) target = $region124
                $region121: #{tpu_custom_call.1} parent=116 // loop_body
                  %v549 = vld [vmem:[%s547] sm:$0xff]
                  %550 = vst [vmem:[%s548] sm:$0xff] %v549
                  %v551 = vld [vmem:[%s547 + $0x10] sm:$0xff]
                  %552 = vst [vmem:[%s548 + $0x8] sm:$0xff] %v551
                $region122: #{tpu_custom_call.1} parent=116 // loop_footer
                  %s546 = sadd.s32 1, %s542
                $region123: #{tpu_custom_call.1} parent=116 // loop_footer_branch
                  %541 = sbr.rel target = $region119
                $region124: #{tpu_custom_call.1} parent=116 // loop_exit
                  _
              $region117: #{tpu_custom_call.1} parent=101 // pred_fallthru
                _
              // Predicated region
              $region125: #{tpu_custom_call.1} parent=101 // pred_check
                _
              $region126: #{tpu_custom_call.1} parent=101 // pred_check_branch
                %554 = sbr.rel target = $region128
              $region127: #{tpu_custom_call.1} parent=101 // pred_region
                _
              $region128: #{tpu_custom_call.1} parent=101 // pred_fallthru
                _
            $region102: #{tpu_custom_call.1} parent=97 // pred_fallthru
              _
            // Predicated region
            $region103: #{tpu_custom_call.1} parent=97 // pred_check
              _
            $region104: #{tpu_custom_call.1} parent=97 // pred_check_branch
              %524 = sbr.rel target = $region106
            $region105: #{tpu_custom_call.1} parent=97 // pred_region
              %s526 = ssub.s32 256, 1
              loop: start=0, step=1, limit=1
              $region107: #{tpu_custom_call.1} parent=105 // loop_pre_header
                _
              $region108: #{tpu_custom_call.1} parent=105 // loop_header
                %s528 = sphi 0, %s532
                %p529 = scmp.ge.s32.totalorder %s528, 1
                %s533 = sphi %s518, %s518
                %s534 = sphi %s516, %s516
              $region109: #{tpu_custom_call.1} parent=105 // loop_header_branch
                %531 = sbr.rel (%p529) target = $region113
              $region110: #{tpu_custom_call.1} parent=105 // loop_body
                %v535 = vld [vmem:[%s533] sm:%s526]
                %536 = vst [vmem:[%s534] sm:%s526] %v535
                %v537 = vld [vmem:[%s533 + $0x10] sm:%s526]
                %538 = vst [vmem:[%s534 + $0x8] sm:%s526] %v537
              $region111: #{tpu_custom_call.1} parent=105 // loop_footer
                %s532 = sadd.s32 1, %s528
              $region112: #{tpu_custom_call.1} parent=105 // loop_footer_branch
                %527 = sbr.rel target = $region108
              $region113: #{tpu_custom_call.1} parent=105 // loop_exit
                _
            $region106: #{tpu_custom_call.1} parent=97 // pred_fallthru
              _
          $region98: #{tpu_custom_call.1} parent=93 // pred_fallthru
            _
          %555 = vnop
        $region94: #{tpu_custom_call.1} parent=51 // pred_fallthru
          _
        // Predicated region
        $region129: #{tpu_custom_call.1} parent=51 // pred_check
          %p556 = pneg %p125
        $region130: #{tpu_custom_call.1} parent=51 // pred_check_branch
          %558 = sbr.rel (%p556) target = $region132
        $region131: #{tpu_custom_call.1} parent=51 // pred_region
          %p559 = scmp.lt.s32.totalorder %s32, 1
          %s560 = scalar_select %p559, %s32, 1
          %s561 = scalar_lea.vmem %s3, %s560
        $region132: #{tpu_custom_call.1} parent=51 // pred_fallthru
          _
      $region52: #{tpu_custom_call.1} parent=5 // pred_fallthru
        _
      %p562 = scmp.le.s32.totalorder 1, %s32
      %p563 = scmp.lt.s32.totalorder %s32, 3
      %p564 = pnand %p562, %p563
      %p565 = pneg %p564
      // Predicated region
      $region133: #{tpu_custom_call.1} parent=5 // pred_check
        _
      $region134: #{tpu_custom_call.1} parent=5 // pred_check_branch
        %567 = sbr.rel (%p564) target = $region136
      $region135: #{tpu_custom_call.1} parent=5 // pred_region
        %s568 = ssub.s32 %s32, 1
        // Predicated region
        $region137: #{tpu_custom_call.1} parent=135 // pred_check
          %p569 = pneg %p53
        $region138: #{tpu_custom_call.1} parent=135 // pred_check_branch
          %571 = sbr.rel (%p569) target = $region140
        $region139: #{tpu_custom_call.1} parent=135 // pred_region
          %573 = dma.done [#allocation4], 16
        $region140: #{tpu_custom_call.1} parent=135 // pred_fallthru
          _
        %s574 = sand.u32 %s66, 1
        %s575 = sand.u32 %s66, 1
        %s576 = smul.addr %s575, 32
        %s577 = scalar_lea.vmem [#allocation5], %s576
        // Predicated region
        $region141: #{tpu_custom_call.1} parent=135 // pred_check
          %p578 = pneg %p79
        $region142: #{tpu_custom_call.1} parent=135 // pred_check_branch
          %580 = sbr.rel (%p578) target = $region144
        $region143: #{tpu_custom_call.1} parent=135 // pred_region
          _
        $region144: #{tpu_custom_call.1} parent=135 // pred_fallthru
          _
        %s581 = sand.u32 %s92, 1
        %s582 = sand.u32 %s92, 1
        %s583 = smul.addr %s582, 16
        %s584 = scalar_lea.vmem [#allocation6], %s583
        // Predicated region
        $region145: #{tpu_custom_call.1} parent=135 // pred_check
          %p585 = pneg %p105
        $region146: #{tpu_custom_call.1} parent=135 // pred_check_branch
          %587 = sbr.rel (%p585) target = $region148
        $region147: #{tpu_custom_call.1} parent=135 // pred_region
          _
        $region148: #{tpu_custom_call.1} parent=135 // pred_fallthru
          _
        %588 = sfence
        %p589 = pneg %p53
        %p590 = pneg %p50
        %s591 = sand.u32 %s66, 1
        %s592 = sand.u32 %s66, 1
        %s593 = smul.addr %s592, 32
        %s594 = scalar_lea.vmem [#allocation5], %s593
        %p595 = pneg %p79
        %p596 = pneg %p76
        %s597 = sand.u32 %s92, 1
        %s598 = sand.u32 %s92, 1
        %s599 = smul.addr %s598, 16
        %s600 = scalar_lea.vmem [#allocation6], %s599
        %p601 = pneg %p105
        %p602 = pneg %p102
        %p603 = scmp.lt.s32.totalorder %s37, 1
        %s604 = scalar_select %p603, %s37, 1
        %s605 = scalar_lea.vmem %s3, %s604
        %p606 = pneg %p131
        %p607 = pneg %p128
        %p608 = pneg %p152
        %p609 = pneg %p149
        %p610 = pneg %p173
        %p611 = pneg %p170
        %p612 = pneg %p194
        %p613 = pneg %p191
        %p614 = pneg %p215
        %p615 = pneg %p212
        %p616 = pneg %p236
        %p617 = pneg %p233
        %p618 = pneg %p257
        %p619 = pneg %p254
        %p620 = pneg %p278
        %p621 = pneg %p275
        %p622 = pneg %p299
        %p623 = pneg %p296
        %p624 = pneg %p325
        %p625 = pneg %p322
        %s626 = sand.u32 %s312, 1
        %s627 = scalar_lea.sflag [#allocation3], %s626
        %s628 = sand.u32 %s312, 1
        %s629 = smul.addr %s628, 32
        %s630 = scalar_lea.vmem [#allocation7], %s629
        %p631 = pneg %p351
        %p632 = pneg %p348
        %s633 = sand.u32 %s37, 1
        %s634 = scalar_lea.sflag [#allocation9], %s633
        %s635 = sand.u32 %s338, 1
        %s636 = scalar_lea.vmem [#allocation8], %s635
        %p637 = pneg %p377
        %p638 = pneg %p374
        %s639 = sand.u32 %s37, 1
        %s640 = scalar_lea.sflag [#allocation9], %s639
        %s641 = sand.u32 %s364, 1
        %s642 = smul.addr %s641, 16
        %s643 = scalar_lea.vmem [#allocation10], %s642
        %p644 = pneg %p403
        %p645 = pneg %p400
        %s646 = sand.u32 %s390, 1
        %s647 = scalar_lea.sflag [#allocation12], %s646
        %s648 = sand.u32 %s390, 1
        %s649 = scalar_lea.vmem [#allocation11], %s648
        %p650 = scmp.lt.s32.totalorder %s37, 1
        %s651 = scalar_select %p650, %s37, 1
        %s652 = scalar_lea.vmem %s3, %s651
        %s653 = sld [smem:[#allocation2]]
        %s654 = sld [smem:[#allocation2 + $0x1]]
        %s655 = sld [smem:[#allocation2 + $0x2]]
        %v656 = vld [vmem:[%s577] sm:$0xff]
        %v657 = vld [vmem:[%s577 + $0x8] sm:$0xff]
        %v658 = vld [vmem:[%s577 + $0x10] sm:$0xff]
        %v659 = vld [vmem:[%s577 + $0x18] sm:$0xff]
        %v660 = vld [vmem:[%s584] sm:$0xff]
        %v661 = vld [vmem:[%s584 + $0x8] sm:$0xf]
        %v662 = vld [vmem:[%s652] sm:$0x1]
        %v663 = vld [vmem:[%s4] sm:$0xff]
        %v664 = vld [vmem:[%s4 + $0x8] sm:$0xf]
        %v665 = vld [vmem:[%s5] sm:$0xff]
        %v666 = vld [vmem:[%s5 + $0x8] sm:$0xf]
        %668 = vset.pattern.permute.xlu0 0
        %669 = vperm.xlu0 %668, %v665
        %v670 = vpop.permute.xlu0 %669
        %673 = vset.pattern.permute.xlu0 0
        %674 = vperm.xlu0 %673, %v666
        %v675 = vpop.permute.xlu0 %674
        %vm677 = vcmask 261120
        %v679 = vsel %vm677, %v663, 0
        %v682 = vsel %vm677, %v664, 0
        %684 = vmatpush.msra.mxu0 0.0
        %685 = vmatpush.msra.mxu0 0.0
        %686 = vmatpush.msra.mxu0 0.0
        %687 = vmatpush.msra.mxu0 0.0
        %688 = vmatpush.msra.mxu0 0.0
        %689 = vmatpush.msra.mxu0 0.0
        %690 = vmatpush.msra.mxu0 0.0
        %691 = vmatpush.msra.mxu0 0.0
        %692 = vmatpush.msra.mxu0 0.0
        %693 = vmatpush.msra.mxu0 0.0
        %694 = vmatpush.msra.mxu0 0.0
        %695 = vmatpush.msra.mxu0 0.0
        %696 = vmatpush.msra.mxu0 %v659
        %697 = vmatpush.msra.mxu0 %v658
        %698 = vmatpush.msra.mxu0 %v657
        %699 = vmatpush.msra.mxu0 %v656
        %700 = vmatmul.f32.gmra.mxu0 %v679
        %v701 = vpop.f32.mrf.mxu0
        %v702 = vadd.f32 %v670, %v701
        %703 = vmatmul.f32.gmra.mxu0 %v682
        %v704 = vpop.f32.mrf.mxu0
        %v705 = vadd.f32 %v675, %v704
        %706 = vdwg.mxu0
        %vm707 = vcmask 1043456
        %v708 = vsel %vm707, %v705, -inf
        %v709 = vmax.f32 %v702, %v708
        %v710 = vrot.slane %v709, 4
        %v711 = vmax.f32 %v709, %v710
        %v712 = vrot.slane %v711, 2
        %v713 = vmax.f32 %v711, %v712
        %v714 = vrot.slane %v713, 1
        %v715 = vmax.f32 %v713, %v714
        %v716 = vsub.f32 %v702, %v715
        %v717 = vsub.f32 %v705, %v715
        %v718 = vmul.f32 %v716, 1.442695
        %v719 = vpow.pop %v718
        %v720 = vmul.f32 %v717, 1.442695
        %v721 = vpow.pop %v720
        %v722 = vsel %vm707, %v721, 0.0
        %v723 = vadd.f32 %v719, %v722
        %v724 = vrot.slane %v723, 4
        %v725 = vadd.f32 %v723, %v724
        %v726 = vrot.slane %v725, 2
        %v727 = vadd.f32 %v725, %v726
        %v728 = vrot.slane %v727, 1
        %v729 = vadd.f32 %v727, %v728
        %v730 = vrcp.pop %v729
        %v731 = vmul.f32 %v729, %v730
        %v732 = vsub.f32 1.0, %v731
        %v733 = vmul.f32 %v730, %v732
        %v734 = vadd.f32 %v730, %v733
        %vm735 = vweird.f32 %v729
        %vm736 = vweird.f32 %v730
        %vm737 = vmor %vm735, %vm736
        %v738 = vsel %vm737, %v730, %v734
        %v739 = vand.u32 2147483647, %v729
        %vm740 = vcmp.eq.f32.partialorder %v739, 8.507059e+37
        %v741 = vand.u32 %v729, 2147483648
        %v742 = vor.u32 1.1754944e-38, %v741
        %v743 = vsel %vm740, %v742, %v738
        %v744 = vmul.f32 %v719, %v743
        %v745 = vmul.f32 %v721, %v743
        %v746 = vld [vmem:[%s7] sm:$0xff]
        %v747 = vld [vmem:[%s7 + $0x8] sm:$0xff]
        %v748 = vld [vmem:[%s7 + $0x10] sm:$0xff]
        %v749 = vld [vmem:[%s7 + $0x18] sm:$0xff]
        %v750 = vld [vmem:[%s7 + $0x20] sm:$0xff]
        %v751 = vld [vmem:[%s7 + $0x28] sm:$0xff]
        %v752 = vld [vmem:[%s7 + $0x30] sm:$0xff]
        %v753 = vld [vmem:[%s7 + $0x38] sm:$0xff]
        %v754 = vld [vmem:[%s7 + $0x40] sm:$0xff]
        %v755 = vld [vmem:[%s7 + $0x48] sm:$0xff]
        %v756 = vld [vmem:[%s7 + $0x50] sm:$0xff]
        %v757 = vld [vmem:[%s7 + $0x58] sm:$0xff]
        %v758 = vld [vmem:[%s7 + $0x60] sm:$0xff]
        %v759 = vld [vmem:[%s7 + $0x68] sm:$0xff]
        %v760 = vld [vmem:[%s7 + $0x70] sm:$0xff]
        %v761 = vld [vmem:[%s7 + $0x78] sm:$0xff]
        %v762 = vld [vmem:[%s7 + $0x80] sm:$0xff]
        %v763 = vld [vmem:[%s7 + $0x88] sm:$0xff]
        %v764 = vld [vmem:[%s7 + $0x90] sm:$0xff]
        %v765 = vld [vmem:[%s7 + $0x98] sm:$0xff]
        %v766 = vld [vmem:[%s7 + $0xa0] sm:$0xff]
        %v767 = vld [vmem:[%s7 + $0xa8] sm:$0xff]
        %v768 = vld [vmem:[%s7 + $0xb0] sm:$0xff]
        %v769 = vld [vmem:[%s7 + $0xb8] sm:$0xff]
        %v770 = vld [vmem:[%s8] sm:$0xff]
        %v771 = vld [vmem:[%s8 + $0x8] sm:$0xff]
        %v772 = vld [vmem:[%s8 + $0x10] sm:$0xff]
        %v773 = vld [vmem:[%s8 + $0x18] sm:$0xff]
        %v774 = vld [vmem:[%s8 + $0x20] sm:$0xff]
        %v775 = vld [vmem:[%s8 + $0x28] sm:$0xff]
        %v776 = vld [vmem:[%s8 + $0x30] sm:$0xff]
        %v777 = vld [vmem:[%s8 + $0x38] sm:$0xff]
        %v778 = vld [vmem:[%s8 + $0x40] sm:$0xff]
        %v779 = vld [vmem:[%s8 + $0x48] sm:$0xff]
        %v780 = vld [vmem:[%s8 + $0x50] sm:$0xff]
        %v781 = vld [vmem:[%s8 + $0x58] sm:$0xff]
        %v782 = vld [vmem:[%s8 + $0x60] sm:$0xff]
        %v783 = vld [vmem:[%s8 + $0x68] sm:$0xff]
        %v784 = vld [vmem:[%s8 + $0x70] sm:$0xff]
        %v785 = vld [vmem:[%s8 + $0x78] sm:$0xff]
        %v786 = vld [vmem:[%s8 + $0x80] sm:$0xff]
        %v787 = vld [vmem:[%s8 + $0x88] sm:$0xff]
        %v788 = vld [vmem:[%s8 + $0x90] sm:$0xff]
        %v789 = vld [vmem:[%s8 + $0x98] sm:$0xff]
        %v790 = vld [vmem:[%s8 + $0xa0] sm:$0xff]
        %v791 = vld [vmem:[%s8 + $0xa8] sm:$0xff]
        %v792 = vld [vmem:[%s8 + $0xb0] sm:$0xff]
        %v793 = vld [vmem:[%s8 + $0xb8] sm:$0xff]
        %795 = vset.pattern.permute.xlu0 0
        %796 = vperm.xlu0 %795, %v770
        %v797 = vpop.permute.xlu0 %796
        %800 = vset.pattern.permute.xlu0 0
        %801 = vperm.xlu0 %800, %v771
        %v802 = vpop.permute.xlu0 %801
        %805 = vset.pattern.permute.xlu0 0
        %806 = vperm.xlu0 %805, %v772
        %v807 = vpop.permute.xlu0 %806
        %810 = vset.pattern.permute.xlu0 0
        %811 = vperm.xlu0 %810, %v773
        %v812 = vpop.permute.xlu0 %811
        %815 = vset.pattern.permute.xlu0 0
        %816 = vperm.xlu0 %815, %v774
        %v817 = vpop.permute.xlu0 %816
        %820 = vset.pattern.permute.xlu0 0
        %821 = vperm.xlu0 %820, %v775
        %v822 = vpop.permute.xlu0 %821
        %825 = vset.pattern.permute.xlu0 0
        %826 = vperm.xlu0 %825, %v776
        %v827 = vpop.permute.xlu0 %826
        %830 = vset.pattern.permute.xlu0 0
        %831 = vperm.xlu0 %830, %v777
        %v832 = vpop.permute.xlu0 %831
        %835 = vset.pattern.permute.xlu0 0
        %836 = vperm.xlu0 %835, %v778
        %v837 = vpop.permute.xlu0 %836
        %840 = vset.pattern.permute.xlu0 0
        %841 = vperm.xlu0 %840, %v779
        %v842 = vpop.permute.xlu0 %841
        %845 = vset.pattern.permute.xlu0 0
        %846 = vperm.xlu0 %845, %v780
        %v847 = vpop.permute.xlu0 %846
        %850 = vset.pattern.permute.xlu0 0
        %851 = vperm.xlu0 %850, %v781
        %v852 = vpop.permute.xlu0 %851
        %855 = vset.pattern.permute.xlu0 0
        %856 = vperm.xlu0 %855, %v782
        %v857 = vpop.permute.xlu0 %856
        %860 = vset.pattern.permute.xlu0 0
        %861 = vperm.xlu0 %860, %v783
        %v862 = vpop.permute.xlu0 %861
        %865 = vset.pattern.permute.xlu0 0
        %866 = vperm.xlu0 %865, %v784
        %v867 = vpop.permute.xlu0 %866
        %870 = vset.pattern.permute.xlu0 0
        %871 = vperm.xlu0 %870, %v785
        %v872 = vpop.permute.xlu0 %871
        %875 = vset.pattern.permute.xlu0 0
        %876 = vperm.xlu0 %875, %v786
        %v877 = vpop.permute.xlu0 %876
        %880 = vset.pattern.permute.xlu0 0
        %881 = vperm.xlu0 %880, %v787
        %v882 = vpop.permute.xlu0 %881
        %885 = vset.pattern.permute.xlu0 0
        %886 = vperm.xlu0 %885, %v788
        %v887 = vpop.permute.xlu0 %886
        %890 = vset.pattern.permute.xlu0 0
        %891 = vperm.xlu0 %890, %v789
        %v892 = vpop.permute.xlu0 %891
        %895 = vset.pattern.permute.xlu0 0
        %896 = vperm.xlu0 %895, %v790
        %v897 = vpop.permute.xlu0 %896
        %900 = vset.pattern.permute.xlu0 0
        %901 = vperm.xlu0 %900, %v791
        %v902 = vpop.permute.xlu0 %901
        %905 = vset.pattern.permute.xlu0 0
        %906 = vperm.xlu0 %905, %v792
        %v907 = vpop.permute.xlu0 %906
        %910 = vset.pattern.permute.xlu0 0
        %911 = vperm.xlu0 %910, %v793
        %v912 = vpop.permute.xlu0 %911
        %vm914 = vcmask 97280
        %v916 = vsel %vm914, %v746, 0
        %v919 = vsel %vm914, %v747, 0
        %v922 = vsel %vm914, %v748, 0
        %v925 = vsel %vm914, %v749, 0
        %v928 = vsel %vm914, %v750, 0
        %v931 = vsel %vm914, %v751, 0
        %v934 = vsel %vm914, %v752, 0
        %v937 = vsel %vm914, %v753, 0
        %v940 = vsel %vm914, %v754, 0
        %v943 = vsel %vm914, %v755, 0
        %v946 = vsel %vm914, %v756, 0
        %v949 = vsel %vm914, %v757, 0
        %v952 = vsel %vm914, %v758, 0
        %v955 = vsel %vm914, %v759, 0
        %v958 = vsel %vm914, %v760, 0
        %v961 = vsel %vm914, %v761, 0
        %v964 = vsel %vm914, %v762, 0
        %v967 = vsel %vm914, %v763, 0
        %v970 = vsel %vm914, %v764, 0
        %v973 = vsel %vm914, %v765, 0
        %v976 = vsel %vm914, %v766, 0
        %v979 = vsel %vm914, %v767, 0
        %v982 = vsel %vm914, %v768, 0
        %v985 = vsel %vm914, %v769, 0
        %v988 = vsel %vm707, %v745, 0
        %990 = vmatpush.msra.mxu0 0.0
        %991 = vmatpush.msra.mxu0 0.0
        %992 = vmatpush.msra.mxu0 0.0
        %993 = vmatpush.msra.mxu0 0.0
        %994 = vmatpush.msra.mxu0 0.0
        %995 = vmatpush.msra.mxu0 0.0
        %996 = vmatpush.msra.mxu0 0.0
        %997 = vmatpush.msra.mxu0 0.0
        %998 = vmatpush.msra.mxu0 0.0
        %999 = vmatpush.msra.mxu0 0.0
        %1000 = vmatpush.msra.mxu0 0.0
        %1001 = vmatpush.msra.mxu0 0.0
        %1002 = vmatpush.msra.mxu0 0.0
        %1003 = vmatpush.msra.mxu0 0.0
        %1004 = vmatpush.msra.mxu0 %v988
        %1005 = vmatpush.msra.mxu0 %v744
        %1006 = vmatmul.f32.gmra.mxu0 %v916
        %v1007 = vpop.f32.mrf.mxu0
        %v1008 = vadd.f32 %v797, %v1007
        %1009 = vmatmul.f32.gmra.mxu0 %v919
        %v1010 = vpop.f32.mrf.mxu0
        %v1011 = vadd.f32 %v802, %v1010
        %1012 = vmatmul.f32.gmra.mxu0 %v922
        %v1013 = vpop.f32.mrf.mxu0
        %v1014 = vadd.f32 %v807, %v1013
        %1015 = vmatmul.f32.gmra.mxu0 %v925
        %v1016 = vpop.f32.mrf.mxu0
        %v1017 = vadd.f32 %v812, %v1016
        %1018 = vmatmul.f32.gmra.mxu0 %v928
        %v1019 = vpop.f32.mrf.mxu0
        %v1020 = vadd.f32 %v817, %v1019
        %1021 = vmatmul.f32.gmra.mxu0 %v931
        %v1022 = vpop.f32.mrf.mxu0
        %v1023 = vadd.f32 %v822, %v1022
        %1024 = vmatmul.f32.gmra.mxu0 %v934
        %v1025 = vpop.f32.mrf.mxu0
        %v1026 = vadd.f32 %v827, %v1025
        %1027 = vmatmul.f32.gmra.mxu0 %v937
        %v1028 = vpop.f32.mrf.mxu0
        %v1029 = vadd.f32 %v832, %v1028
        %1030 = vmatmul.f32.gmra.mxu0 %v940
        %v1031 = vpop.f32.mrf.mxu0
        %v1032 = vadd.f32 %v837, %v1031
        %1033 = vmatmul.f32.gmra.mxu0 %v943
        %v1034 = vpop.f32.mrf.mxu0
        %v1035 = vadd.f32 %v842, %v1034
        %1036 = vmatmul.f32.gmra.mxu0 %v946
        %v1037 = vpop.f32.mrf.mxu0
        %v1038 = vadd.f32 %v847, %v1037
        %1039 = vmatmul.f32.gmra.mxu0 %v949
        %v1040 = vpop.f32.mrf.mxu0
        %v1041 = vadd.f32 %v852, %v1040
        %1042 = vmatmul.f32.gmra.mxu0 %v952
        %v1043 = vpop.f32.mrf.mxu0
        %v1044 = vadd.f32 %v857, %v1043
        %1045 = vmatmul.f32.gmra.mxu0 %v955
        %v1046 = vpop.f32.mrf.mxu0
        %v1047 = vadd.f32 %v862, %v1046
        %1048 = vmatmul.f32.gmra.mxu0 %v958
        %v1049 = vpop.f32.mrf.mxu0
        %v1050 = vadd.f32 %v867, %v1049
        %1051 = vmatmul.f32.gmra.mxu0 %v961
        %v1052 = vpop.f32.mrf.mxu0
        %v1053 = vadd.f32 %v872, %v1052
        %1054 = vmatmul.f32.gmra.mxu0 %v964
        %v1055 = vpop.f32.mrf.mxu0
        %v1056 = vadd.f32 %v877, %v1055
        %1057 = vmatmul.f32.gmra.mxu0 %v967
        %v1058 = vpop.f32.mrf.mxu0
        %v1059 = vadd.f32 %v882, %v1058
        %1060 = vmatmul.f32.gmra.mxu0 %v970
        %v1061 = vpop.f32.mrf.mxu0
        %v1062 = vadd.f32 %v887, %v1061
        %1063 = vmatmul.f32.gmra.mxu0 %v973
        %v1064 = vpop.f32.mrf.mxu0
        %v1065 = vadd.f32 %v892, %v1064
        %1066 = vmatmul.f32.gmra.mxu0 %v976
        %v1067 = vpop.f32.mrf.mxu0
        %v1068 = vadd.f32 %v897, %v1067
        %1069 = vmatmul.f32.gmra.mxu0 %v979
        %v1070 = vpop.f32.mrf.mxu0
        %v1071 = vadd.f32 %v902, %v1070
        %1072 = vmatmul.f32.gmra.mxu0 %v982
        %v1073 = vpop.f32.mrf.mxu0
        %v1074 = vadd.f32 %v907, %v1073
        %1075 = vmatmul.f32.gmra.mxu0 %v985
        %v1076 = vpop.f32.mrf.mxu0
        %v1077 = vadd.f32 %v912, %v1076
        %1078 = vdwg.mxu0
        %v1079 = vld [vmem:[%s10] sm:$0xff]
        %v1080 = vld [vmem:[%s10 + $0x8] sm:$0xff]
        %v1081 = vld [vmem:[%s10 + $0x10] sm:$0xff]
        %v1082 = vld [vmem:[%s10 + $0x18] sm:$0xff]
        %v1083 = vld [vmem:[%s10 + $0x20] sm:$0xff]
        %v1084 = vld [vmem:[%s10 + $0x28] sm:$0xff]
        %v1085 = vld [vmem:[%s10 + $0x30] sm:$0xff]
        %v1086 = vld [vmem:[%s10 + $0x38] sm:$0xff]
        %v1088 = vsel %vm914, %v1079, 0
        %v1091 = vsel %vm914, %v1080, 0
        %v1094 = vsel %vm914, %v1081, 0
        %v1097 = vsel %vm914, %v1082, 0
        %v1100 = vsel %vm914, %v1083, 0
        %v1103 = vsel %vm914, %v1084, 0
        %v1106 = vsel %vm914, %v1085, 0
        %v1109 = vsel %vm914, %v1086, 0
        %v1112 = vsel %vm707, %v661, 0
        %1114 = vmatpush.msra.mxu0 0.0
        %1115 = vmatpush.msra.mxu0 0.0
        %1116 = vmatpush.msra.mxu0 0.0
        %1117 = vmatpush.msra.mxu0 0.0
        %1118 = vmatpush.msra.mxu0 0.0
        %1119 = vmatpush.msra.mxu0 0.0
        %1120 = vmatpush.msra.mxu0 0.0
        %1121 = vmatpush.msra.mxu0 0.0
        %1122 = vmatpush.msra.mxu0 0.0
        %1123 = vmatpush.msra.mxu0 0.0
        %1124 = vmatpush.msra.mxu0 0.0
        %1125 = vmatpush.msra.mxu0 0.0
        %1126 = vmatpush.msra.mxu0 0.0
        %1127 = vmatpush.msra.mxu0 0.0
        %1128 = vmatpush.msra.mxu0 %v1112
        %1129 = vmatpush.msra.mxu0 %v660
        %1130 = vmatmul.f32.gmra.mxu0 %v1088
        %v1131 = vpop.f32.mrf.mxu0
        %v1132 = vadd.f32 0.0, %v1131
        %1133 = vmatmul.f32.gmra.mxu0 %v1091
        %v1134 = vpop.f32.mrf.mxu0
        %v1135 = vadd.f32 0.0, %v1134
        %1136 = vmatmul.f32.gmra.mxu0 %v1094
        %v1137 = vpop.f32.mrf.mxu0
        %v1138 = vadd.f32 0.0, %v1137
        %1139 = vmatmul.f32.gmra.mxu0 %v1097
        %v1140 = vpop.f32.mrf.mxu0
        %v1141 = vadd.f32 0.0, %v1140
        %1142 = vmatmul.f32.gmra.mxu0 %v1100
        %v1143 = vpop.f32.mrf.mxu0
        %v1144 = vadd.f32 0.0, %v1143
        %1145 = vmatmul.f32.gmra.mxu0 %v1103
        %v1146 = vpop.f32.mrf.mxu0
        %v1147 = vadd.f32 0.0, %v1146
        %1148 = vmatmul.f32.gmra.mxu0 %v1106
        %v1149 = vpop.f32.mrf.mxu0
        %v1150 = vadd.f32 0.0, %v1149
        %1151 = vmatmul.f32.gmra.mxu0 %v1109
        %v1152 = vpop.f32.mrf.mxu0
        %v1153 = vadd.f32 0.0, %v1152
        %1154 = vdwg.mxu0
        %v1155 = vmax.f32 %v1008, 0.0
        %v1156 = vmax.f32 %v1011, 0.0
        %v1157 = vmax.f32 %v1014, 0.0
        %v1158 = vmax.f32 %v1017, 0.0
        %v1159 = vmax.f32 %v1020, 0.0
        %v1160 = vmax.f32 %v1023, 0.0
        %v1161 = vmax.f32 %v1026, 0.0
        %v1162 = vmax.f32 %v1029, 0.0
        %v1163 = vmax.f32 %v1032, 0.0
        %v1164 = vmax.f32 %v1035, 0.0
        %v1165 = vmax.f32 %v1038, 0.0
        %v1166 = vmax.f32 %v1041, 0.0
        %v1167 = vmax.f32 %v1044, 0.0
        %v1168 = vmax.f32 %v1047, 0.0
        %v1169 = vmax.f32 %v1050, 0.0
        %v1170 = vmax.f32 %v1053, 0.0
        %v1171 = vadd.f32 %v1056, %v1132
        %v1172 = vadd.f32 %v1059, %v1135
        %v1173 = vadd.f32 %v1062, %v1138
        %v1174 = vadd.f32 %v1065, %v1141
        %v1175 = vadd.f32 %v1068, %v1144
        %v1176 = vadd.f32 %v1071, %v1147
        %v1177 = vadd.f32 %v1074, %v1150
        %v1178 = vadd.f32 %v1077, %v1153
        %v1179 = vmax.f32 %v1171, 0.0
        %v1180 = vmax.f32 %v1172, 0.0
        %v1181 = vmax.f32 %v1173, 0.0
        %v1182 = vmax.f32 %v1174, 0.0
        %v1183 = vmax.f32 %v1175, 0.0
        %v1184 = vmax.f32 %v1176, 0.0
        %v1185 = vmax.f32 %v1177, 0.0
        %v1186 = vmax.f32 %v1178, 0.0
        %v1187 = vld [vmem:[%s9] sm:$0xff]
        %v1188 = vld [vmem:[%s9 + $0x8] sm:$0xff]
        %v1189 = vld [vmem:[%s9 + $0x10] sm:$0xff]
        %v1190 = vld [vmem:[%s9 + $0x18] sm:$0xff]
        %v1191 = vld [vmem:[%s9 + $0x20] sm:$0xff]
        %v1192 = vld [vmem:[%s9 + $0x28] sm:$0xff]
        %v1193 = vld [vmem:[%s9 + $0x30] sm:$0xff]
        %v1194 = vld [vmem:[%s9 + $0x38] sm:$0xff]
        %v1195 = vld [vmem:[%s9 + $0x40] sm:$0xff]
        %v1196 = vld [vmem:[%s9 + $0x48] sm:$0xff]
        %v1197 = vld [vmem:[%s9 + $0x50] sm:$0xff]
        %v1198 = vld [vmem:[%s9 + $0x58] sm:$0xff]
        %v1199 = vld [vmem:[%s9 + $0x60] sm:$0xff]
        %v1200 = vld [vmem:[%s9 + $0x68] sm:$0xff]
        %v1201 = vld [vmem:[%s9 + $0x70] sm:$0xff]
        %v1202 = vld [vmem:[%s9 + $0x78] sm:$0xff]
        %v1203 = vld [vmem:[%s9 + $0x80] sm:$0xff]
        %v1204 = vld [vmem:[%s9 + $0x88] sm:$0xff]
        %v1205 = vld [vmem:[%s9 + $0x90] sm:$0xff]
        %v1206 = vld [vmem:[%s9 + $0x98] sm:$0xff]
        %v1207 = vld [vmem:[%s9 + $0xa0] sm:$0xff]
        %v1208 = vld [vmem:[%s9 + $0xa8] sm:$0xff]
        %v1209 = vld [vmem:[%s9 + $0xb0] sm:$0xff]
        %v1210 = vld [vmem:[%s9 + $0xb8] sm:$0xff]
        %1212 = vset.pattern.permute.xlu0 0
        %1213 = vperm.xlu0 %1212, %v1187
        %v1214 = vpop.permute.xlu0 %1213
        %1217 = vset.pattern.permute.xlu0 0
        %1218 = vperm.xlu0 %1217, %v1188
        %v1219 = vpop.permute.xlu0 %1218
        %1222 = vset.pattern.permute.xlu0 0
        %1223 = vperm.xlu0 %1222, %v1189
        %v1224 = vpop.permute.xlu0 %1223
        %1227 = vset.pattern.permute.xlu0 0
        %1228 = vperm.xlu0 %1227, %v1190
        %v1229 = vpop.permute.xlu0 %1228
        %1232 = vset.pattern.permute.xlu0 0
        %1233 = vperm.xlu0 %1232, %v1191
        %v1234 = vpop.permute.xlu0 %1233
        %1237 = vset.pattern.permute.xlu0 0
        %1238 = vperm.xlu0 %1237, %v1192
        %v1239 = vpop.permute.xlu0 %1238
        %1242 = vset.pattern.permute.xlu0 0
        %1243 = vperm.xlu0 %1242, %v1193
        %v1244 = vpop.permute.xlu0 %1243
        %1247 = vset.pattern.permute.xlu0 0
        %1248 = vperm.xlu0 %1247, %v1194
        %v1249 = vpop.permute.xlu0 %1248
        %1252 = vset.pattern.permute.xlu0 0
        %1253 = vperm.xlu0 %1252, %v1195
        %v1254 = vpop.permute.xlu0 %1253
        %1257 = vset.pattern.permute.xlu0 0
        %1258 = vperm.xlu0 %1257, %v1196
        %v1259 = vpop.permute.xlu0 %1258
        %1262 = vset.pattern.permute.xlu0 0
        %1263 = vperm.xlu0 %1262, %v1197
        %v1264 = vpop.permute.xlu0 %1263
        %1267 = vset.pattern.permute.xlu0 0
        %1268 = vperm.xlu0 %1267, %v1198
        %v1269 = vpop.permute.xlu0 %1268
        %1272 = vset.pattern.permute.xlu0 0
        %1273 = vperm.xlu0 %1272, %v1199
        %v1274 = vpop.permute.xlu0 %1273
        %1277 = vset.pattern.permute.xlu0 0
        %1278 = vperm.xlu0 %1277, %v1200
        %v1279 = vpop.permute.xlu0 %1278
        %1282 = vset.pattern.permute.xlu0 0
        %1283 = vperm.xlu0 %1282, %v1201
        %v1284 = vpop.permute.xlu0 %1283
        %1287 = vset.pattern.permute.xlu0 0
        %1288 = vperm.xlu0 %1287, %v1202
        %v1289 = vpop.permute.xlu0 %1288
        %v1291 = vmul.f32 %v1214, %v1155
        %v1292 = vmul.f32 %v1219, %v1156
        %v1293 = vmul.f32 %v1224, %v1157
        %v1294 = vmul.f32 %v1229, %v1158
        %v1295 = vmul.f32 %v1234, %v1159
        %v1296 = vmul.f32 %v1239, %v1160
        %v1297 = vmul.f32 %v1244, %v1161
        %v1298 = vmul.f32 %v1249, %v1162
        %v1299 = vmul.f32 %v1254, %v1163
        %v1300 = vmul.f32 %v1259, %v1164
        %v1301 = vmul.f32 %v1264, %v1165
        %v1302 = vmul.f32 %v1269, %v1166
        %v1303 = vmul.f32 %v1274, %v1167
        %v1304 = vmul.f32 %v1279, %v1168
        %v1305 = vmul.f32 %v1284, %v1169
        %v1306 = vmul.f32 %v1289, %v1170
        %v1307 = vadd.f32 %v1291, %v1292
        %v1308 = vadd.f32 %v1307, %v1293
        %v1309 = vadd.f32 %v1308, %v1294
        %v1310 = vadd.f32 %v1309, %v1295
        %v1311 = vadd.f32 %v1310, %v1296
        %v1312 = vadd.f32 %v1311, %v1297
        %v1313 = vadd.f32 %v1312, %v1298
        %v1314 = vadd.f32 %v1313, %v1299
        %v1315 = vadd.f32 %v1314, %v1300
        %v1316 = vadd.f32 %v1315, %v1301
        %v1317 = vadd.f32 %v1316, %v1302
        %v1318 = vadd.f32 %v1317, %v1303
        %v1319 = vadd.f32 %v1318, %v1304
        %v1320 = vadd.f32 %v1319, %v1305
        %v1321 = vadd.f32 %v1320, %v1306
        %v1322 = vrot.slane %v1321, 4
        %v1323 = vadd.f32 %v1321, %v1322
        %v1324 = vrot.slane %v1323, 2
        %v1325 = vadd.f32 %v1323, %v1324
        %v1326 = vrot.slane %v1325, 1
        %v1327 = vadd.f32 %v1325, %v1326
        %v1328 = vstv %s653
        %v1329 = vadd.f32 %v1327, %v1328
        %v1330 = vxor.u32 %v1329, 2147483648
        %v1331 = vmul.f32 %v1330, 1.442695
        %v1332 = vpow.pop %v1331
        %v1333 = vadd.f32 %v1332, 1.0
        %v1334 = vrcp.pop %v1333
        %v1335 = vmul.f32 %v1333, %v1334
        %v1336 = vsub.f32 1.0, %v1335
        %v1337 = vmul.f32 %v1334, %v1336
        %v1338 = vadd.f32 %v1334, %v1337
        %vm1339 = vweird.f32 %v1333
        %vm1340 = vweird.f32 %v1334
        %vm1341 = vmor %vm1339, %vm1340
        %v1342 = vsel %vm1341, %v1334, %v1338
        %v1343 = vand.u32 2147483647, %v1333
        %vm1344 = vcmp.eq.f32.partialorder %v1343, 8.507059e+37
        %v1345 = vand.u32 %v1333, 2147483648
        %v1346 = vor.u32 1.1754944e-38, %v1345
        %v1347 = vsel %vm1344, %v1346, %v1342
        %v1348 = vmul.f32 1.0, %v1347
        %1350 = vset.pattern.permute.xlu0 0
        %1351 = vperm.xlu0 %1350, %v1203
        %v1352 = vpop.permute.xlu0 %1351
        %1355 = vset.pattern.permute.xlu0 0
        %1356 = vperm.xlu0 %1355, %v1204
        %v1357 = vpop.permute.xlu0 %1356
        %1360 = vset.pattern.permute.xlu0 0
        %1361 = vperm.xlu0 %1360, %v1205
        %v1362 = vpop.permute.xlu0 %1361
        %1365 = vset.pattern.permute.xlu0 0
        %1366 = vperm.xlu0 %1365, %v1206
        %v1367 = vpop.permute.xlu0 %1366
        %1370 = vset.pattern.permute.xlu0 0
        %1371 = vperm.xlu0 %1370, %v1207
        %v1372 = vpop.permute.xlu0 %1371
        %1375 = vset.pattern.permute.xlu0 0
        %1376 = vperm.xlu0 %1375, %v1208
        %v1377 = vpop.permute.xlu0 %1376
        %1380 = vset.pattern.permute.xlu0 0
        %1381 = vperm.xlu0 %1380, %v1209
        %v1382 = vpop.permute.xlu0 %1381
        %1385 = vset.pattern.permute.xlu0 0
        %1386 = vperm.xlu0 %1385, %v1210
        %v1387 = vpop.permute.xlu0 %1386
        %v1389 = vmul.f32 %v1352, %v1179
        %v1390 = vmul.f32 %v1357, %v1180
        %v1391 = vmul.f32 %v1362, %v1181
        %v1392 = vmul.f32 %v1367, %v1182
        %v1393 = vmul.f32 %v1372, %v1183
        %v1394 = vmul.f32 %v1377, %v1184
        %v1395 = vmul.f32 %v1382, %v1185
        %v1396 = vmul.f32 %v1387, %v1186
        %v1397 = vadd.f32 %v1389, %v1390
        %v1398 = vadd.f32 %v1397, %v1391
        %v1399 = vadd.f32 %v1398, %v1392
        %v1400 = vadd.f32 %v1399, %v1393
        %v1401 = vadd.f32 %v1400, %v1394
        %v1402 = vadd.f32 %v1401, %v1395
        %v1403 = vadd.f32 %v1402, %v1396
        %v1404 = vrot.slane %v1403, 4
        %v1405 = vadd.f32 %v1403, %v1404
        %v1406 = vrot.slane %v1405, 2
        %v1407 = vadd.f32 %v1405, %v1406
        %v1408 = vrot.slane %v1407, 1
        %v1409 = vadd.f32 %v1407, %v1408
        %v1410 = vstv %s654
        %v1411 = vadd.f32 %v1409, %v1410
        %v1412 = vxor.u32 %v1411, 2147483648
        %v1413 = vmul.f32 %v1412, 1.442695
        %v1414 = vpow.pop %v1413
        %v1415 = vadd.f32 %v1414, 1.0
        %v1416 = vrcp.pop %v1415
        %v1417 = vmul.f32 %v1415, %v1416
        %v1418 = vsub.f32 1.0, %v1417
        %v1419 = vmul.f32 %v1416, %v1418
        %v1420 = vadd.f32 %v1416, %v1419
        %vm1421 = vweird.f32 %v1415
        %vm1422 = vweird.f32 %v1416
        %vm1423 = vmor %vm1421, %vm1422
        %v1424 = vsel %vm1423, %v1416, %v1420
        %v1425 = vand.u32 2147483647, %v1415
        %vm1426 = vcmp.eq.f32.partialorder %v1425, 8.507059e+37
        %v1427 = vand.u32 %v1415, 2147483648
        %v1428 = vor.u32 1.1754944e-38, %v1427
        %v1429 = vsel %vm1426, %v1428, %v1424
        %v1430 = vmul.f32 1.0, %v1429
        %v1431 = vld [vmem:[%s11] sm:$0xff]
        %v1432 = vld [vmem:[%s11 + $0x8] sm:$0xff]
        %v1433 = vld [vmem:[%s11 + $0x10] sm:$0xff]
        %v1434 = vld [vmem:[%s11 + $0x18] sm:$0xff]
        %v1435 = vld [vmem:[%s11 + $0x20] sm:$0xff]
        %v1436 = vld [vmem:[%s11 + $0x28] sm:$0xff]
        %v1437 = vld [vmem:[%s11 + $0x30] sm:$0xff]
        %v1438 = vld [vmem:[%s11 + $0x38] sm:$0xff]
        %v1439 = vld [vmem:[%s11 + $0x40] sm:$0xff]
        %v1440 = vld [vmem:[%s11 + $0x48] sm:$0xff]
        %v1441 = vld [vmem:[%s11 + $0x50] sm:$0xff]
        %v1442 = vld [vmem:[%s11 + $0x58] sm:$0xff]
        %v1443 = vld [vmem:[%s11 + $0x60] sm:$0xff]
        %v1444 = vld [vmem:[%s11 + $0x68] sm:$0xff]
        %v1445 = vld [vmem:[%s11 + $0x70] sm:$0xff]
        %v1446 = vld [vmem:[%s11 + $0x78] sm:$0xff]
        %v1447 = vld [vmem:[%s6] sm:$0xff]
        %v1448 = vld [vmem:[%s6 + $0x8] sm:$0xff]
        %v1449 = vld [vmem:[%s6 + $0x10] sm:$0xff]
        %v1450 = vld [vmem:[%s6 + $0x18] sm:$0xff]
        %1452 = vset.pattern.permute.xlu0 0
        %1453 = vperm.xlu0 %1452, %v1431
        %v1454 = vpop.permute.xlu0 %1453
        %1457 = vset.pattern.permute.xlu0 0
        %1458 = vperm.xlu0 %1457, %v1432
        %v1459 = vpop.permute.xlu0 %1458
        %1462 = vset.pattern.permute.xlu0 0
        %1463 = vperm.xlu0 %1462, %v1433
        %v1464 = vpop.permute.xlu0 %1463
        %1467 = vset.pattern.permute.xlu0 0
        %1468 = vperm.xlu0 %1467, %v1434
        %v1469 = vpop.permute.xlu0 %1468
        %v1471 = vmul.f32 %v1454, %v1348
        %v1472 = vmul.f32 %v1459, %v1348
        %v1473 = vmul.f32 %v1464, %v1348
        %v1474 = vmul.f32 %v1469, %v1348
        %v1476 = vsel %vm677, %v1447, 0
        %v1479 = vsel %vm677, %v1448, 0
        %v1482 = vsel %vm677, %v1449, 0
        %v1485 = vsel %vm677, %v1450, 0
        %1487 = vmatpush.msra.mxu0 0.0
        %1488 = vmatpush.msra.mxu0 0.0
        %1489 = vmatpush.msra.mxu0 0.0
        %1490 = vmatpush.msra.mxu0 0.0
        %1491 = vmatpush.msra.mxu0 0.0
        %1492 = vmatpush.msra.mxu0 0.0
        %1493 = vmatpush.msra.mxu0 0.0
        %1494 = vmatpush.msra.mxu0 0.0
        %1495 = vmatpush.msra.mxu0 0.0
        %1496 = vmatpush.msra.mxu0 0.0
        %1497 = vmatpush.msra.mxu0 0.0
        %1498 = vmatpush.msra.mxu0 0.0
        %1499 = vmatpush.msra.mxu0 %v659
        %1500 = vmatpush.msra.mxu0 %v658
        %1501 = vmatpush.msra.mxu0 %v657
        %1502 = vmatpush.msra.mxu0 %v656
        %1503 = vmatmul.f32.gmra.mxu0 %v1476
        %v1504 = vpop.f32.mrf.mxu0
        %v1505 = vadd.f32 %v1471, %v1504
        %1506 = vmatmul.f32.gmra.mxu0 %v1479
        %v1507 = vpop.f32.mrf.mxu0
        %v1508 = vadd.f32 %v1472, %v1507
        %1509 = vmatmul.f32.gmra.mxu0 %v1482
        %v1510 = vpop.f32.mrf.mxu0
        %v1511 = vadd.f32 %v1473, %v1510
        %1512 = vmatmul.f32.gmra.mxu0 %v1485
        %v1513 = vpop.f32.mrf.mxu0
        %v1514 = vadd.f32 %v1474, %v1513
        %1515 = vdwg.mxu0
        %1517 = vset.pattern.permute.xlu0 0
        %1518 = vperm.xlu0 %1517, %v1435
        %v1519 = vpop.permute.xlu0 %1518
        %1522 = vset.pattern.permute.xlu0 0
        %1523 = vperm.xlu0 %1522, %v1436
        %v1524 = vpop.permute.xlu0 %1523
        %1527 = vset.pattern.permute.xlu0 0
        %1528 = vperm.xlu0 %1527, %v1437
        %v1529 = vpop.permute.xlu0 %1528
        %1532 = vset.pattern.permute.xlu0 0
        %1533 = vperm.xlu0 %1532, %v1438
        %v1534 = vpop.permute.xlu0 %1533
        %v1536 = vadd.f32 %v1505, %v1519
        %v1537 = vadd.f32 %v1508, %v1524
        %v1538 = vadd.f32 %v1511, %v1529
        %v1539 = vadd.f32 %v1514, %v1534
        %v1540 = vstv %s655
        %v1541 = vmul.f32 %v1540, %v662
        %s1542 = ssub.f32 1.0, %s655
        %v1543 = vstv %s1542
        %v1544 = vmul.f32 %v1543, %v1430
        %v1545 = vadd.f32 %v1541, %v1544
        %1547 = vset.pattern.permute.xlu0 0
        %1548 = vperm.xlu0 %1547, %v1439
        %v1549 = vpop.permute.xlu0 %1548
        %1552 = vset.pattern.permute.xlu0 0
        %1553 = vperm.xlu0 %1552, %v1440
        %v1554 = vpop.permute.xlu0 %1553
        %1557 = vset.pattern.permute.xlu0 0
        %1558 = vperm.xlu0 %1557, %v1441
        %v1559 = vpop.permute.xlu0 %1558
        %1562 = vset.pattern.permute.xlu0 0
        %1563 = vperm.xlu0 %1562, %v1442
        %v1564 = vpop.permute.xlu0 %1563
        %v1567 = vperm.slane %v1545, 0
        %v1569 = vmul.f32 %v1549, %v1567
        %v1570 = vmul.f32 %v1554, %v1567
        %v1571 = vmul.f32 %v1559, %v1567
        %v1572 = vmul.f32 %v1564, %v1567
        %v1573 = vadd.f32 %v1536, %v1569
        %v1574 = vadd.f32 %v1537, %v1570
        %v1575 = vadd.f32 %v1538, %v1571
        %v1576 = vadd.f32 %v1539, %v1572
        %1578 = vset.pattern.permute.xlu0 0
        %1579 = vperm.xlu0 %1578, %v1443
        %v1580 = vpop.permute.xlu0 %1579
        %1583 = vset.pattern.permute.xlu0 0
        %1584 = vperm.xlu0 %1583, %v1444
        %v1585 = vpop.permute.xlu0 %1584
        %1588 = vset.pattern.permute.xlu0 0
        %1589 = vperm.xlu0 %1588, %v1445
        %v1590 = vpop.permute.xlu0 %1589
        %1593 = vset.pattern.permute.xlu0 0
        %1594 = vperm.xlu0 %1593, %v1446
        %v1595 = vpop.permute.xlu0 %1594
        %v1597 = vadd.f32 %v1573, %v1580
        %v1598 = vadd.f32 %v1574, %v1585
        %v1599 = vadd.f32 %v1575, %v1590
        %v1600 = vadd.f32 %v1576, %v1595
        %1601 = vst [vmem:[%s630] sm:$0xff] %v1597
        %1602 = vst [vmem:[%s630 + $0x8] sm:$0xff] %v1598
        %1603 = vst [vmem:[%s630 + $0x10] sm:$0xff] %v1599
        %1604 = vst [vmem:[%s630 + $0x18] sm:$0xff] %v1600
        %1605 = vst [vmem:[%s636] sm:$0x1] %v1545
        %1606 = vst [vmem:[%s643] sm:$0xff] %v744
        %1607 = vst [vmem:[%s643 + $0x8] sm:$0xf] %v745
        %1608 = vst [vmem:[%s649] sm:$0x1] %v1430
        %s1609 = sand.u32 %s312, 1
        %s1610 = scalar_lea.sflag [#allocation3], %s1609
        %s1611 = sand.u32 %s312, 1
        %s1612 = smul.addr %s1611, 32
        %s1613 = scalar_lea.vmem [#allocation7], %s1612
        %s1614 = sand.u32 %s37, 1
        %s1615 = scalar_lea.sflag [#allocation9], %s1614
        %s1616 = sand.u32 %s338, 1
        %s1617 = scalar_lea.vmem [#allocation8], %s1616
        %s1618 = sand.u32 %s37, 1
        %s1619 = scalar_lea.sflag [#allocation9], %s1618
        %s1620 = sand.u32 %s364, 1
        %s1621 = smul.addr %s1620, 16
        %s1622 = scalar_lea.vmem [#allocation10], %s1621
        %s1623 = sand.u32 %s390, 1
        %s1624 = scalar_lea.sflag [#allocation12], %s1623
        %s1625 = sand.u32 %s390, 1
        %s1626 = scalar_lea.vmem [#allocation11], %s1625
        // Predicated region
        $region149: #{tpu_custom_call.1} parent=135 // pred_check
          %p1627 = pneg %p322
        $region150: #{tpu_custom_call.1} parent=135 // pred_check_branch
          %1629 = sbr.rel (%p1627) target = $region152
        $region151: #{tpu_custom_call.1} parent=135 // pred_region
          %1631 = vsyncadd %s1610, 0
          %s1632 = smul.addr %s37, 8
          %s1633 = scalar_lea.hbm %s12, %s1632
          %s1634 = sshll.u32 %s1613, 4
          %s1635 = int_to_ptr.vmem [resolvable:$true] %s1634
          %s1636 = sshll.u32 %s1633, 4
          %s1637 = int_to_ptr.hbm [resolvable:$true] %s1636
          %1642 = dma.vmem_to_hbm [thread:$0]  %s1635, 512, %s1637, %s1610, 128, 256, 8
        $region152: #{tpu_custom_call.1} parent=135 // pred_fallthru
          _
        // Predicated region
        $region153: #{tpu_custom_call.1} parent=135 // pred_check
          %p1643 = pneg %p348
        $region154: #{tpu_custom_call.1} parent=135 // pred_check_branch
          %1645 = sbr.rel (%p1643) target = $region156
        $region155: #{tpu_custom_call.1} parent=135 // pred_region
          %1647 = vsyncadd %s1615, 0
          %s1648 = scalar_lea.hbm %s13, %s37
          %s1650 = sshll.u32 %s1617, 4
          %s1651 = int_to_ptr.vmem [resolvable:$true] %s1650
          %s1652 = sshll.u32 %s1648, 4
          %s1653 = int_to_ptr.hbm [resolvable:$true] %s1652
          %1655 = dma.vmem_to_hbm [thread:$0]  %s1651, 16, %s1653, %s1615
        $region156: #{tpu_custom_call.1} parent=135 // pred_fallthru
          _
        // Predicated region
        $region157: #{tpu_custom_call.1} parent=135 // pred_check
          %p1656 = pneg %p374
        $region158: #{tpu_custom_call.1} parent=135 // pred_check_branch
          %1658 = sbr.rel (%p1656) target = $region160
        $region159: #{tpu_custom_call.1} parent=135 // pred_region
          %1660 = vsyncadd %s1619, 0
          %s1661 = smul.addr %s37, 8
          %s1662 = scalar_lea.hbm %s14, %s1661
          %s1663 = sshll.u32 %s1622, 4
          %s1664 = int_to_ptr.vmem [resolvable:$true] %s1663
          %s1665 = sshll.u32 %s1662, 4
          %s1666 = int_to_ptr.hbm [resolvable:$true] %s1665
          %1671 = dma.vmem_to_hbm [thread:$0]  %s1664, 256, %s1666, %s1619, 128, 256, 8
        $region160: #{tpu_custom_call.1} parent=135 // pred_fallthru
          _
        // Predicated region
        $region161: #{tpu_custom_call.1} parent=135 // pred_check
          %p1672 = pneg %p400
        $region162: #{tpu_custom_call.1} parent=135 // pred_check_branch
          %1674 = sbr.rel (%p1672) target = $region164
        $region163: #{tpu_custom_call.1} parent=135 // pred_region
          %1676 = vsyncadd %s1624, 0
          %s1677 = scalar_lea.hbm %s15, %s37
          %s1679 = sshll.u32 %s1626, 4
          %s1680 = int_to_ptr.vmem [resolvable:$true] %s1679
          %s1681 = sshll.u32 %s1677, 4
          %s1682 = int_to_ptr.hbm [resolvable:$true] %s1681
          %1684 = dma.vmem_to_hbm [thread:$0]  %s1680, 16, %s1682, %s1624
        $region164: #{tpu_custom_call.1} parent=135 // pred_fallthru
          _
      $region136: #{tpu_custom_call.1} parent=5 // pred_fallthru
        _
      %p1685 = scmp.le.s32.totalorder 2, %s32
      // Predicated region
      $region165: #{tpu_custom_call.1} parent=5 // pred_check
        %p1686 = pneg %p1685
      $region166: #{tpu_custom_call.1} parent=5 // pred_check_branch
        %1688 = sbr.rel (%p1686) target = $region168
      $region167: #{tpu_custom_call.1} parent=5 // pred_region
        %s1689 = ssub.s32 %s32, 2
        // Predicated region
        $region169: #{tpu_custom_call.1} parent=167 // pred_check
          %p1690 = pneg %p328
        $region170: #{tpu_custom_call.1} parent=167 // pred_check_branch
          %1692 = sbr.rel (%p1690) target = $region172
        $region171: #{tpu_custom_call.1} parent=167 // pred_region
          %s1693 = sand.u32 %s313, 1
          %s1694 = scalar_lea.sflag [#allocation3], %s1693
          %s1695 = sand.u32 %s313, 1
          %s1696 = smul.addr %s1695, 32
          %s1697 = scalar_lea.vmem [#allocation7], %s1696
          %1699 = dma.done %s1694, 512
        $region172: #{tpu_custom_call.1} parent=167 // pred_fallthru
          _
        // Predicated region
        $region173: #{tpu_custom_call.1} parent=167 // pred_check
          %p1700 = pneg %p354
        $region174: #{tpu_custom_call.1} parent=167 // pred_check_branch
          %1702 = sbr.rel (%p1700) target = $region176
        $region175: #{tpu_custom_call.1} parent=167 // pred_region
          %s1703 = sand.u32 %s38, 1
          %s1704 = scalar_lea.sflag [#allocation9], %s1703
          %s1705 = sand.u32 %s339, 1
          %s1706 = scalar_lea.vmem [#allocation8], %s1705
          %1708 = dma.done %s1704, 16
        $region176: #{tpu_custom_call.1} parent=167 // pred_fallthru
          _
        // Predicated region
        $region177: #{tpu_custom_call.1} parent=167 // pred_check
          %p1709 = pneg %p380
        $region178: #{tpu_custom_call.1} parent=167 // pred_check_branch
          %1711 = sbr.rel (%p1709) target = $region180
        $region179: #{tpu_custom_call.1} parent=167 // pred_region
          %s1712 = sand.u32 %s38, 1
          %s1713 = scalar_lea.sflag [#allocation9], %s1712
          %s1714 = sand.u32 %s365, 1
          %s1715 = smul.addr %s1714, 16
          %s1716 = scalar_lea.vmem [#allocation10], %s1715
          %1718 = dma.done %s1713, 256
        $region180: #{tpu_custom_call.1} parent=167 // pred_fallthru
          _
        // Predicated region
        $region181: #{tpu_custom_call.1} parent=167 // pred_check
          %p1719 = pneg %p406
        $region182: #{tpu_custom_call.1} parent=167 // pred_check_branch
          %1721 = sbr.rel (%p1719) target = $region184
        $region183: #{tpu_custom_call.1} parent=167 // pred_region
          %s1722 = sand.u32 %s391, 1
          %s1723 = scalar_lea.sflag [#allocation12], %s1722
          %s1724 = sand.u32 %s391, 1
          %s1725 = scalar_lea.vmem [#allocation11], %s1724
          %1727 = dma.done %s1723, 16
        $region184: #{tpu_custom_call.1} parent=167 // pred_fallthru
          _
      $region168: #{tpu_custom_call.1} parent=5 // pred_fallthru
        _
    $region6: #{tpu_custom_call.1} parent=1 // loop_footer
      %s36 = sadd.s32 1, %s32
    $region7: #{tpu_custom_call.1} parent=1 // loop_footer_branch
      %31 = sbr.rel target = $region3
    $region8: #{tpu_custom_call.1} parent=1 // loop_exit
      _
    %1728 = vsyncpa [#allocation3], 1
    %s1729 = scalar_lea.sflag [#allocation3], 1
    %1730 = vsyncpa %s1729, 1
    %1731 = vsyncpa [#allocation9], 1
    %s1732 = scalar_lea.sflag [#allocation9], 1
    %1733 = vsyncpa %s1732, 1
    %1734 = vsyncpa [#allocation12], 1
    %s1735 = scalar_lea.sflag [#allocation12], 1
    %1736 = vsyncpa %s1735, 1
    %1737 = vsyncpa [#allocation4], 1
    %s1738 = scalar_lea.sflag [#allocation4], 1
    %1739 = vsyncpa %s1738, 1

</llo_original>
